<compile_context>
chip_gen: v7x
topology: tpu7x:2x2x1
jax: 0.10.0
libtpu: 0.0.40
codegen_flags: <defaults>
</compile_context>

<pallas_src>
import functools

import jax
import jax.numpy as jnp
from jax.experimental import pallas as pl
from jax.experimental.pallas import tpu as pltpu


def _round_up(x: int, m: int) -> int:
    return ((x + m - 1) // m) * m


def _make_point_head_kernel(num_fc: int, coarse_pred_each_layer: bool):
    """Fused MLP over channels-first blocks: fine (nin, tp), coarse (C, tp) -> out (C, tp)."""

    def kernel(fine_ref, coarse_ref, *rest):
        out_ref = rest[-1]
        prm = rest[:-1]

        fine = fine_ref[...]      # (nin, tile_p)
        coarse = coarse_ref[...]  # (num_classes, tile_p)

        idx = 0

        def nxt():
            nonlocal idx
            r = prm[idx]
            idx += 1
            return r[...]

        # ---- fc layer 0: input is always cat([fine, coarse]) -> split-weight matmuls ----
        w_f = nxt()   # (fc_dim, nin)
        w_c = nxt()   # (fc_dim, num_classes)
        b0 = nxt()    # (fc_dim, 1)
        h = (jnp.dot(w_f, fine, preferred_element_type=jnp.float32)
             + jnp.dot(w_c, coarse, preferred_element_type=jnp.float32)
             + b0)
        h = jnp.maximum(h, 0.0)

        # ---- fc layers 1 .. num_fc-1 ----
        for _ in range(1, num_fc):
            w_h = nxt()                       # (fc_dim, fc_dim)
            acc = jnp.dot(w_h, h, preferred_element_type=jnp.float32)
            if coarse_pred_each_layer:
                w_ck = nxt()                  # (fc_dim, num_classes)
                acc = acc + jnp.dot(w_ck, coarse, preferred_element_type=jnp.float32)
            b_k = nxt()                       # (fc_dim, 1)
            h = jnp.maximum(acc + b_k, 0.0)

        # ---- predictor ----
        w_p = nxt()                           # (num_classes, fc_dim)
        acc = jnp.dot(w_p, h, preferred_element_type=jnp.float32)
        if coarse_pred_each_layer:
            w_pc = nxt()                      # (num_classes, num_classes)
            acc = acc + jnp.dot(w_pc, coarse, preferred_element_type=jnp.float32)
        b_p = nxt()                           # (num_classes, 1)
        out_ref[...] = acc + b_p

    return kernel


def init_point_head_params(key, nin, num_classes, fc_dim, num_fc,
                           coarse_pred_each_layer=True):
    """Deterministic init matching the PyTorch module.

    Weights are stored as (out_ch, in_ch) == torch Conv1d weight[:, :, 0], so the
    channels-first kernel computes W @ x + b exactly like the torch module.
    """
    params = []
    fc_dim_in = nin + num_classes
    for _ in range(num_fc):
        key, wk = jax.random.split(key)
        # kaiming_normal_(mode='fan_out', nonlinearity='relu'): fan_out = fc_dim*1
        std = (2.0 / fc_dim) ** 0.5
        w = std * jax.random.normal(wk, (fc_dim, fc_dim_in), dtype=jnp.float32)
        b = jnp.zeros((fc_dim,), dtype=jnp.float32)
        params.append((w, b))
        fc_dim_in = fc_dim + (num_classes if coarse_pred_each_layer else 0)
    key, wk = jax.random.split(key)
    wp = 0.001 * jax.random.normal(wk, (num_classes, fc_dim_in), dtype=jnp.float32)
    bp = jnp.zeros((num_classes,), dtype=jnp.float32)
    params.append((wp, bp))
    return params


def _split_params(params, nin, num_classes, fc_dim, num_fc, coarse_pred_each_layer):
    """Split each full (out, in) weight into hidden / coarse parts (host-side, cheap)."""
    flat = []
    w0, b0 = params[0]                               # input = cat([fine, coarse]) always
    flat += [w0[:, :nin], w0[:, nin:], b0.reshape(-1, 1)]
    for k in range(1, num_fc):
        wk, bk = params[k]
        if coarse_pred_each_layer:
            flat += [wk[:, :fc_dim], wk[:, fc_dim:], bk.reshape(-1, 1)]
        else:
            flat += [wk, bk.reshape(-1, 1)]
    wp, bp = params[num_fc]
    if coarse_pred_each_layer:
        flat += [wp[:, :fc_dim], wp[:, fc_dim:], bp.reshape(-1, 1)]
    else:
        flat += [wp, bp.reshape(-1, 1)]
    return flat


@functools.partial(jax.jit, static_argnames=("num_fc", "coarse_pred_each_layer", "tile_p"))
def standard_point_head_forward(fine_grained_features, coarse_features, params,
                                num_fc, coarse_pred_each_layer=True, tile_p=2048):
    """fine_grained_features: (N, nin, P), coarse_features: (N, num_classes, P)."""
    N, nin, P = fine_grained_features.shape
    _, num_classes, _ = coarse_features.shape
    fc_dim = params[0][0].shape[0]

    # Points tile: 128-aligned, clamped to the padded points extent.  Pad P up to a
    # multiple of tile_p (instead of asserting divisibility) and trim afterwards.
    tile_p = max(128, min(_round_up(tile_p, 128), _round_up(P, 128)))
    P_pad = _round_up(P, tile_p)
    if P_pad != P:
        pad = [(0, 0), (0, 0), (0, P_pad - P)]
        fine_grained_features = jnp.pad(fine_grained_features, pad)
        coarse_features = jnp.pad(coarse_features, pad)

    flat_params = _split_params(params, nin, num_classes, fc_dim, num_fc,
                                coarse_pred_each_layer)
    kernel = _make_point_head_kernel(num_fc, coarse_pred_each_layer)

    grid = (N, P_pad // tile_p)   # batch x point-tiles; >=2 steps lets v7x use both TCs
    in_specs = [
        pl.BlockSpec((None, nin, tile_p), lambda n, p: (n, 0, p)),
        pl.BlockSpec((None, num_classes, tile_p), lambda n, p: (n, 0, p)),
    ]
    # Tiny weights/biases: fully resident (constant index_map -> no per-step DMA refetch).
    for w in flat_params:
        in_specs.append(pl.BlockSpec(w.shape, lambda n, p: (0, 0)))

    out = pl.pallas_call(
        kernel,
        out_shape=jax.ShapeDtypeStruct((N, num_classes, P_pad), jnp.float32),
        grid_spec=pltpu.PrefetchScalarGridSpec(
            num_scalar_prefetch=0,
            grid=grid,
            in_specs=in_specs,
            out_specs=pl.BlockSpec((None, num_classes, tile_p), lambda n, p: (n, 0, p)),
        ),
        compiler_params=pltpu.CompilerParams(
            dimension_semantics=("parallel", "parallel")),
    )(fine_grained_features, coarse_features, *flat_params)

    return out[:, :, :P]


def _reference_forward(fine, coarse, params, num_fc, coarse_pred_each_layer=True):
    """Pure-JAX reference with the exact PyTorch semantics (concat + conv1x1)."""
    x = jnp.concatenate([fine, coarse], axis=1)          # (N, C_in, P)
    for k in range(num_fc):
        w, b = params[k]                                  # (fc_dim, C_in), (fc_dim,)
        x = jnp.maximum(jnp.einsum("oc,ncp->nop", w, x) + b[None, :, None], 0.0)
        if coarse_pred_each_layer:
            x = jnp.concatenate([x, coarse], axis=1)
    wp, bp = params[num_fc]
    return jnp.einsum("oc,ncp->nop", wp, x) + bp[None, :, None]


if __name__ == "__main__":
    # Small configuration consistent with the module.
    N = 2            # batch
    nin = 8          # fine-grained feature channels
    num_classes = 4  # coarse prediction channels / output classes
    fc_dim = 32
    num_fc = 3
    P = 200          # deliberately NOT a multiple of 128 to exercise the pad/trim path
    coarse_pred_each_layer = True

    key = jax.random.PRNGKey(0)
    k_fine, k_coarse, k_params = jax.random.split(key, 3)

    fine = jax.random.normal(k_fine, (N, nin, P), dtype=jnp.float32)
    coarse = jax.random.normal(k_coarse, (N, num_classes, P), dtype=jnp.float32)
    params = init_point_head_params(
        k_params, nin, num_classes, fc_dim, num_fc, coarse_pred_each_layer)

    out = standard_point_head_forward(
        fine, coarse, params, num_fc=num_fc,
        coarse_pred_each_layer=coarse_pred_each_layer)
    out = jax.block_until_ready(out)

    ref = _reference_forward(fine, coarse, params, num_fc, coarse_pred_each_layer)
    assert out.shape == (N, num_classes, P), out.shape
    max_err = float(jnp.max(jnp.abs(out - ref)))
    assert jnp.allclose(out, ref, atol=1e-4, rtol=1e-4), f"mismatch vs reference: {max_err}"

    print("KERNEL_OK")
</pallas_src>

<mosaic_0001>
module attributes {stable_mosaic.version = 11 : i64} {
  func.func @kernel(%arg0: i32, %arg1: i32, %arg2: memref<1x8x256xf32, #tpu.memory_space<vmem>>, %arg3: memref<1x4x256xf32, #tpu.memory_space<vmem>>, %arg4: memref<32x8xf32, #tpu.memory_space<vmem>>, %arg5: memref<32x4xf32, #tpu.memory_space<vmem>>, %arg6: memref<32x1xf32, #tpu.memory_space<vmem>>, %arg7: memref<32x32xf32, #tpu.memory_space<vmem>>, %arg8: memref<32x4xf32, #tpu.memory_space<vmem>>, %arg9: memref<32x1xf32, #tpu.memory_space<vmem>>, %arg10: memref<32x32xf32, #tpu.memory_space<vmem>>, %arg11: memref<32x4xf32, #tpu.memory_space<vmem>>, %arg12: memref<32x1xf32, #tpu.memory_space<vmem>>, %arg13: memref<4x32xf32, #tpu.memory_space<vmem>>, %arg14: memref<4x4xf32, #tpu.memory_space<vmem>>, %arg15: memref<4x1xf32, #tpu.memory_space<vmem>>, %arg16: memref<1x4x256xf32, #tpu.memory_space<vmem>>) attributes {dimension_semantics = [#tpu.dimension_semantics<parallel>, #tpu.dimension_semantics<parallel>], iteration_bounds = array<i64: 2, 1>, scalar_prefetch = 0 : i64, scratch_operands = 0 : i64, tpu.core_type = #tpu.core_type<tc>, window_params = [{transform_indices = @transform_0, window_bounds = array<i64: 1, 8, 256>}, {transform_indices = @transform_1, window_bounds = array<i64: 1, 4, 256>}, {pipeline_mode = #tpu.pipeline_mode<synchronous>, transform_indices = @transform_2, window_bounds = array<i64: 32, 8>}, {pipeline_mode = #tpu.pipeline_mode<synchronous>, transform_indices = @transform_3, window_bounds = array<i64: 32, 4>}, {pipeline_mode = #tpu.pipeline_mode<synchronous>, transform_indices = @transform_4, window_bounds = array<i64: 32, 1>}, {pipeline_mode = #tpu.pipeline_mode<synchronous>, transform_indices = @transform_5, window_bounds = array<i64: 32, 32>}, {pipeline_mode = #tpu.pipeline_mode<synchronous>, transform_indices = @transform_6, window_bounds = array<i64: 32, 4>}, {pipeline_mode = #tpu.pipeline_mode<synchronous>, transform_indices = @transform_7, window_bounds = array<i64: 32, 1>}, {pipeline_mode = #tpu.pipeline_mode<synchronous>, transform_indices = @transform_8, window_bounds = array<i64: 32, 32>}, {pipeline_mode = #tpu.pipeline_mode<synchronous>, transform_indices = @transform_9, window_bounds = array<i64: 32, 4>}, {pipeline_mode = #tpu.pipeline_mode<synchronous>, transform_indices = @transform_10, window_bounds = array<i64: 32, 1>}, {pipeline_mode = #tpu.pipeline_mode<synchronous>, transform_indices = @transform_11, window_bounds = array<i64: 4, 32>}, {pipeline_mode = #tpu.pipeline_mode<synchronous>, transform_indices = @transform_12, window_bounds = array<i64: 4, 4>}, {pipeline_mode = #tpu.pipeline_mode<synchronous>, transform_indices = @transform_13, window_bounds = array<i64: 4, 1>}, {transform_indices = @transform_14, window_bounds = array<i64: 1, 4, 256>}]} {
    %c0 = arith.constant 0 : index
    %c0_0 = arith.constant 0 : index
    %c0_1 = arith.constant 0 : index
    %0 = vector.load %arg2[%c0, %c0_0, %c0_1] : memref<1x8x256xf32, #tpu.memory_space<vmem>>, vector<1x8x256xf32>
    %1 = vector.shape_cast %0 : vector<1x8x256xf32> to vector<8x256xf32>
    %c0_2 = arith.constant 0 : index
    %c0_3 = arith.constant 0 : index
    %c0_4 = arith.constant 0 : index
    %2 = vector.load %arg3[%c0_2, %c0_3, %c0_4] : memref<1x4x256xf32, #tpu.memory_space<vmem>>, vector<1x4x256xf32>
    %3 = vector.shape_cast %2 : vector<1x4x256xf32> to vector<4x256xf32>
    %c0_5 = arith.constant 0 : index
    %c0_6 = arith.constant 0 : index
    %4 = vector.load %arg4[%c0_5, %c0_6] : memref<32x8xf32, #tpu.memory_space<vmem>>, vector<32x8xf32>
    %c0_7 = arith.constant 0 : index
    %c0_8 = arith.constant 0 : index
    %5 = vector.load %arg5[%c0_7, %c0_8] : memref<32x4xf32, #tpu.memory_space<vmem>>, vector<32x4xf32>
    %c0_9 = arith.constant 0 : index
    %c0_10 = arith.constant 0 : index
    %6 = vector.load %arg6[%c0_9, %c0_10] : memref<32x1xf32, #tpu.memory_space<vmem>>, vector<32x1xf32>
    %cst = arith.constant dense<0.000000e+00> : vector<32x256xf32>
    %7 = tpu.matmul %4, %1, %cst {dimension_numbers = #tpu.dot_dimension_numbers<[1], [0], [0], [1], [0, 0, 1, 1], [], []>} : vector<32x8xf32>, vector<8x256xf32>, vector<32x256xf32> -> vector<32x256xf32>
    %cst_11 = arith.constant dense<0.000000e+00> : vector<32x256xf32>
    %8 = tpu.matmul %5, %3, %cst_11 {dimension_numbers = #tpu.dot_dimension_numbers<[1], [0], [0], [1], [0, 0, 1, 1], [], []>} : vector<32x4xf32>, vector<4x256xf32>, vector<32x256xf32> -> vector<32x256xf32>
    %9 = arith.addf %7, %8 : vector<32x256xf32>
    %10 = vector.broadcast %6 : vector<32x1xf32> to vector<32x256xf32>
    %11 = arith.addf %9, %10 : vector<32x256xf32>
    %cst_12 = arith.constant 0.000000e+00 : f32
    %12 = vector.broadcast %cst_12 : f32 to vector<32x256xf32>
    %13 = arith.maximumf %11, %12 : vector<32x256xf32>
    %c0_13 = arith.constant 0 : index
    %c0_14 = arith.constant 0 : index
    %14 = vector.load %arg7[%c0_13, %c0_14] : memref<32x32xf32, #tpu.memory_space<vmem>>, vector<32x32xf32>
    %cst_15 = arith.constant dense<0.000000e+00> : vector<32x256xf32>
    %15 = tpu.matmul %14, %13, %cst_15 {dimension_numbers = #tpu.dot_dimension_numbers<[1], [0], [0], [1], [0, 0, 1, 1], [], []>} : vector<32x32xf32>, vector<32x256xf32>, vector<32x256xf32> -> vector<32x256xf32>
    %c0_16 = arith.constant 0 : index
    %c0_17 = arith.constant 0 : index
    %16 = vector.load %arg8[%c0_16, %c0_17] : memref<32x4xf32, #tpu.memory_space<vmem>>, vector<32x4xf32>
    %cst_18 = arith.constant dense<0.000000e+00> : vector<32x256xf32>
    %17 = tpu.matmul %16, %3, %cst_18 {dimension_numbers = #tpu.dot_dimension_numbers<[1], [0], [0], [1], [0, 0, 1, 1], [], []>} : vector<32x4xf32>, vector<4x256xf32>, vector<32x256xf32> -> vector<32x256xf32>
    %18 = arith.addf %15, %17 : vector<32x256xf32>
    %c0_19 = arith.constant 0 : index
    %c0_20 = arith.constant 0 : index
    %19 = vector.load %arg9[%c0_19, %c0_20] : memref<32x1xf32, #tpu.memory_space<vmem>>, vector<32x1xf32>
    %20 = vector.broadcast %19 : vector<32x1xf32> to vector<32x256xf32>
    %21 = arith.addf %18, %20 : vector<32x256xf32>
    %cst_21 = arith.constant 0.000000e+00 : f32
    %22 = vector.broadcast %cst_21 : f32 to vector<32x256xf32>
    %23 = arith.maximumf %21, %22 : vector<32x256xf32>
    %c0_22 = arith.constant 0 : index
    %c0_23 = arith.constant 0 : index
    %24 = vector.load %arg10[%c0_22, %c0_23] : memref<32x32xf32, #tpu.memory_space<vmem>>, vector<32x32xf32>
    %cst_24 = arith.constant dense<0.000000e+00> : vector<32x256xf32>
    %25 = tpu.matmul %24, %23, %cst_24 {dimension_numbers = #tpu.dot_dimension_numbers<[1], [0], [0], [1], [0, 0, 1, 1], [], []>} : vector<32x32xf32>, vector<32x256xf32>, vector<32x256xf32> -> vector<32x256xf32>
    %c0_25 = arith.constant 0 : index
    %c0_26 = arith.constant 0 : index
    %26 = vector.load %arg11[%c0_25, %c0_26] : memref<32x4xf32, #tpu.memory_space<vmem>>, vector<32x4xf32>
    %cst_27 = arith.constant dense<0.000000e+00> : vector<32x256xf32>
    %27 = tpu.matmul %26, %3, %cst_27 {dimension_numbers = #tpu.dot_dimension_numbers<[1], [0], [0], [1], [0, 0, 1, 1], [], []>} : vector<32x4xf32>, vector<4x256xf32>, vector<32x256xf32> -> vector<32x256xf32>
    %28 = arith.addf %25, %27 : vector<32x256xf32>
    %c0_28 = arith.constant 0 : index
    %c0_29 = arith.constant 0 : index
    %29 = vector.load %arg12[%c0_28, %c0_29] : memref<32x1xf32, #tpu.memory_space<vmem>>, vector<32x1xf32>
    %30 = vector.broadcast %29 : vector<32x1xf32> to vector<32x256xf32>
    %31 = arith.addf %28, %30 : vector<32x256xf32>
    %cst_30 = arith.constant 0.000000e+00 : f32
    %32 = vector.broadcast %cst_30 : f32 to vector<32x256xf32>
    %33 = arith.maximumf %31, %32 : vector<32x256xf32>
    %c0_31 = arith.constant 0 : index
    %c0_32 = arith.constant 0 : index
    %34 = vector.load %arg13[%c0_31, %c0_32] : memref<4x32xf32, #tpu.memory_space<vmem>>, vector<4x32xf32>
    %cst_33 = arith.constant dense<0.000000e+00> : vector<4x256xf32>
    %35 = tpu.matmul %34, %33, %cst_33 {dimension_numbers = #tpu.dot_dimension_numbers<[1], [0], [0], [1], [0, 0, 1, 1], [], []>} : vector<4x32xf32>, vector<32x256xf32>, vector<4x256xf32> -> vector<4x256xf32>
    %c0_34 = arith.constant 0 : index
    %c0_35 = arith.constant 0 : index
    %36 = vector.load %arg14[%c0_34, %c0_35] : memref<4x4xf32, #tpu.memory_space<vmem>>, vector<4x4xf32>
    %cst_36 = arith.constant dense<0.000000e+00> : vector<4x256xf32>
    %37 = tpu.matmul %36, %3, %cst_36 {dimension_numbers = #tpu.dot_dimension_numbers<[1], [0], [0], [1], [0, 0, 1, 1], [], []>} : vector<4x4xf32>, vector<4x256xf32>, vector<4x256xf32> -> vector<4x256xf32>
    %38 = arith.addf %35, %37 : vector<4x256xf32>
    %c0_37 = arith.constant 0 : index
    %c0_38 = arith.constant 0 : index
    %39 = vector.load %arg15[%c0_37, %c0_38] : memref<4x1xf32, #tpu.memory_space<vmem>>, vector<4x1xf32>
    %40 = vector.broadcast %39 : vector<4x1xf32> to vector<4x256xf32>
    %41 = arith.addf %38, %40 : vector<4x256xf32>
    %c0_39 = arith.constant 0 : index
    %c0_40 = arith.constant 0 : index
    %c0_41 = arith.constant 0 : index
    %42 = vector.load %arg16[%c0_39, %c0_40, %c0_41] : memref<1x4x256xf32, #tpu.memory_space<vmem>>, vector<1x4x256xf32>
    %43 = vector.shape_cast %42 : vector<1x4x256xf32> to vector<4x256xf32>
    %44 = vector.shape_cast %41 : vector<4x256xf32> to vector<1x4x256xf32>
    tpu.vector_store %arg16[%c0_39, %c0_40, %c0_41], %44 {strides = array<i32>} : memref<1x4x256xf32, #tpu.memory_space<vmem>>, vector<1x4x256xf32>,
    return
  }
  func.func @transform_0(%arg0: i32, %arg1: i32) -> (i32, i32, i32) {
    %c0_i32 = arith.constant 0 : i32
    %c0_i32_0 = arith.constant 0 : i32
    return %arg0, %c0_i32, %arg1 : i32, i32, i32
  }
  func.func @transform_1(%arg0: i32, %arg1: i32) -> (i32, i32, i32) {
    %c0_i32 = arith.constant 0 : i32
    %c0_i32_0 = arith.constant 0 : i32
    return %arg0, %c0_i32, %arg1 : i32, i32, i32
  }
  func.func @transform_2(%arg0: i32, %arg1: i32) -> (i32, i32) {
    %c0_i32 = arith.constant 0 : i32
    %c0_i32_0 = arith.constant 0 : i32
    %c0_i32_1 = arith.constant 0 : i32
    return %c0_i32, %c0_i32_0 : i32, i32
  }
  func.func @transform_3(%arg0: i32, %arg1: i32) -> (i32, i32) {
    %c0_i32 = arith.constant 0 : i32
    %c0_i32_0 = arith.constant 0 : i32
    %c0_i32_1 = arith.constant 0 : i32
    return %c0_i32, %c0_i32_0 : i32, i32
  }
  func.func @transform_4(%arg0: i32, %arg1: i32) -> (i32, i32) {
    %c0_i32 = arith.constant 0 : i32
    %c0_i32_0 = arith.constant 0 : i32
    %c0_i32_1 = arith.constant 0 : i32
    return %c0_i32, %c0_i32_0 : i32, i32
  }
  func.func @transform_5(%arg0: i32, %arg1: i32) -> (i32, i32) {
    %c0_i32 = arith.constant 0 : i32
    %c0_i32_0 = arith.constant 0 : i32
    %c0_i32_1 = arith.constant 0 : i32
    return %c0_i32, %c0_i32_0 : i32, i32
  }
  func.func @transform_6(%arg0: i32, %arg1: i32) -> (i32, i32) {
    %c0_i32 = arith.constant 0 : i32
    %c0_i32_0 = arith.constant 0 : i32
    %c0_i32_1 = arith.constant 0 : i32
    return %c0_i32, %c0_i32_0 : i32, i32
  }
  func.func @transform_7(%arg0: i32, %arg1: i32) -> (i32, i32) {
    %c0_i32 = arith.constant 0 : i32
    %c0_i32_0 = arith.constant 0 : i32
    %c0_i32_1 = arith.constant 0 : i32
    return %c0_i32, %c0_i32_0 : i32, i32
  }
  func.func @transform_8(%arg0: i32, %arg1: i32) -> (i32, i32) {
    %c0_i32 = arith.constant 0 : i32
    %c0_i32_0 = arith.constant 0 : i32
    %c0_i32_1 = arith.constant 0 : i32
    return %c0_i32, %c0_i32_0 : i32, i32
  }
  func.func @transform_9(%arg0: i32, %arg1: i32) -> (i32, i32) {
    %c0_i32 = arith.constant 0 : i32
    %c0_i32_0 = arith.constant 0 : i32
    %c0_i32_1 = arith.constant 0 : i32
    return %c0_i32, %c0_i32_0 : i32, i32
  }
  func.func @transform_10(%arg0: i32, %arg1: i32) -> (i32, i32) {
    %c0_i32 = arith.constant 0 : i32
    %c0_i32_0 = arith.constant 0 : i32
    %c0_i32_1 = arith.constant 0 : i32
    return %c0_i32, %c0_i32_0 : i32, i32
  }
  func.func @transform_11(%arg0: i32, %arg1: i32) -> (i32, i32) {
    %c0_i32 = arith.constant 0 : i32
    %c0_i32_0 = arith.constant 0 : i32
    %c0_i32_1 = arith.constant 0 : i32
    return %c0_i32, %c0_i32_0 : i32, i32
  }
  func.func @transform_12(%arg0: i32, %arg1: i32) -> (i32, i32) {
    %c0_i32 = arith.constant 0 : i32
    %c0_i32_0 = arith.constant 0 : i32
    %c0_i32_1 = arith.constant 0 : i32
    return %c0_i32, %c0_i32_0 : i32, i32
  }
  func.func @transform_13(%arg0: i32, %arg1: i32) -> (i32, i32) {
    %c0_i32 = arith.constant 0 : i32
    %c0_i32_0 = arith.constant 0 : i32
    %c0_i32_1 = arith.constant 0 : i32
    return %c0_i32, %c0_i32_0 : i32, i32
  }
  func.func @transform_14(%arg0: i32, %arg1: i32) -> (i32, i32, i32) {
    %c0_i32 = arith.constant 0 : i32
    %c0_i32_0 = arith.constant 0 : i32
    return %arg0, %c0_i32, %arg1 : i32, i32, i32
  }
}

</mosaic_0001>

<llo_original>
// kernel: standard_point_head_forward.1
$region0: #{standard_point_head_forward.1}
  #allocation0 [shape = 'u32[]', space=smem, size = 0x4, offset = 0x4, fixed_abs, tag = 'smem constant byte address 0x4 - core index']
  #allocation1 [shape = 'u32[144,128]{1,0:T(1,128)}', space=vmem, size = 0x12000, scoped, tag = 'internal scratch']
  %s0 = inlined_call_operand.vmem [shape: f32[2,8,256], index: 0, kind: input, shape index: {}]
  %s1 = inlined_call_operand.vmem [shape: f32[2,4,256], index: 1, kind: input, shape index: {}]
  %s2 = inlined_call_operand.vmem [shape: f32[32,8], index: 2, kind: input, shape index: {}]
  %s3 = inlined_call_operand.vmem [shape: f32[32,4], index: 3, kind: input, shape index: {}]
  %s4 = inlined_call_operand.vmem [shape: f32[32,1], index: 4, kind: input, shape index: {}]
  %s5 = inlined_call_operand.vmem [shape: f32[32,32], index: 5, kind: input, shape index: {}]
  %s6 = inlined_call_operand.vmem [shape: f32[32,4], index: 6, kind: input, shape index: {}]
  %s7 = inlined_call_operand.vmem [shape: f32[32,1], index: 7, kind: input, shape index: {}]
  %s8 = inlined_call_operand.vmem [shape: f32[32,32], index: 8, kind: input, shape index: {}]
  %s9 = inlined_call_operand.vmem [shape: f32[32,4], index: 9, kind: input, shape index: {}]
  %s10 = inlined_call_operand.vmem [shape: f32[32,1], index: 10, kind: input, shape index: {}]
  %s11 = inlined_call_operand.vmem [shape: f32[4,32], index: 11, kind: input, shape index: {}]
  %s12 = inlined_call_operand.vmem [shape: f32[4,4], index: 12, kind: input, shape index: {}]
  %s13 = inlined_call_operand.vmem [shape: f32[4,1], index: 13, kind: input, shape index: {}]
  %s14 = inlined_call_operand.hbm [shape: f32[2,4,256], index: 14, kind: output, shape index: {}]
  %s15 = sld [smem:[#allocation0]]
  $region89: #{standard_point_head_forward.1} parent=0
    _
  %s17 = ssub.s32 1, %s15
  %s18 = scalar_select 0, %s17, %s15
  $region1: #{standard_point_head_forward.1} parent=0
    #allocation2 [shape = 'u8[8192]{0}', space=vmem, size = 0x2000, scoped, tag = 'output window, operand 0']
    #allocation3 [shape = 's32[2]{0}', space=sflag, size = 0x8, scoped, tag = 'scoped memory for standard_point_head_forward.1']
    %19 = vsyncpa [#allocation3], 0
    %s20 = scalar_lea.sflag [#allocation3], 1
    %21 = vsyncpa %s20, 0
    loop: start=0, step=1, limit=4
    $region2: #{standard_point_head_forward.1} parent=1 // loop_pre_header
      _
    $region3: #{standard_point_head_forward.1} parent=1 // loop_header
      %s23 = sphi 0, %s27
      %p24 = scmp.ge.s32.totalorder %s23, 4
      %s30 = sphi 0, %s42
      %s31 = sphi 0, %s38
      %s32 = sphi 0, %s30
      %s33 = sphi 0, %s31
      %s34 = sphi 0, %s32
      %s35 = sphi 0, %s33
      %s47 = sphi 0, %s49
      %s50 = sphi 0, %s47
      %s51 = sphi 0, %s50
      %s67 = sphi 0, %s51
      %s75 = sphi 0, %s77
      %s78 = sphi 0, %s75
      %s79 = sphi 0, %s78
      %s95 = sphi 0, %s79
      %s99 = sphi 0, %s99
      %s101 = sphi 0, %s99
      %s102 = sphi 0, %s101
      %s116 = sphi 0, %s102
      %s120 = sphi 0, %s120
      %s122 = sphi 0, %s120
      %s123 = sphi 0, %s122
      %s137 = sphi 0, %s123
      %s141 = sphi 0, %s141
      %s143 = sphi 0, %s141
      %s144 = sphi 0, %s143
      %s158 = sphi 0, %s144
      %s162 = sphi 0, %s162
      %s164 = sphi 0, %s162
      %s165 = sphi 0, %s164
      %s179 = sphi 0, %s165
      %s183 = sphi 0, %s183
      %s185 = sphi 0, %s183
      %s186 = sphi 0, %s185
      %s200 = sphi 0, %s186
      %s204 = sphi 0, %s204
      %s206 = sphi 0, %s204
      %s207 = sphi 0, %s206
      %s221 = sphi 0, %s207
      %s225 = sphi 0, %s225
      %s227 = sphi 0, %s225
      %s228 = sphi 0, %s227
      %s242 = sphi 0, %s228
      %s246 = sphi 0, %s246
      %s248 = sphi 0, %s246
      %s249 = sphi 0, %s248
      %s263 = sphi 0, %s249
      %s267 = sphi 0, %s267
      %s269 = sphi 0, %s267
      %s270 = sphi 0, %s269
      %s284 = sphi 0, %s270
      %s288 = sphi 0, %s288
      %s290 = sphi 0, %s288
      %s291 = sphi 0, %s290
      %s305 = sphi 0, %s291
      %s309 = sphi 0, %s309
      %s311 = sphi 0, %s309
      %s312 = sphi 0, %s311
      %s326 = sphi 0, %s312
      %s330 = sphi 0, %s330
      %s332 = sphi 0, %s330
      %s333 = sphi 0, %s332
      %s347 = sphi 0, %s333
      %s355 = sphi 0, %s357
      %s358 = sphi 0, %s355
      %s359 = sphi 0, %s358
      %s375 = sphi 0, %s359
    $region4: #{standard_point_head_forward.1} parent=1 // loop_header_branch
      %26 = sbr.rel (%p24) target = $region8
    $region5: #{standard_point_head_forward.1} parent=1 // loop_body
      %s28 = ssub.s32 %s23, 1
      %s29 = ssub.s32 %s23, 2
      %s36 = sadd.s32 1, %s31
      %p37 = scmp.ge.s32.totalorder %s36, 1
      %s38 = scalar_select %p37, 0, %s36
      %s39 = sadd.s32 1, %s30
      %s40 = scalar_select %p37, %s39, %s30
      %p41 = scmp.ge.s32.totalorder %s40, 2
      %s42 = scalar_select %p41, 0, %s40
      %s43 = ssub.s32 %s30, %s42
      %s44 = ssub.s32 %s31, %s38
      %s45 = sor.u32 %s43, %s44
      %p46 = scmp.eq.s32.totalorder %s45, 0
      %s48 = sadd.s32 %s47, 1
      %s49 = scalar_select %p46, %s47, %s48
      %p52 = pneg %p46
      %p53 = scmp.eq.s32.totalorder %s23, 1
      %p54 = por %p52, %p53
      %p55 = scmp.ne.s32.totalorder %s47, %s50
      %p56 = scmp.eq.s32.totalorder %s23, 0
      %p57 = por %p55, %p56
      %p58 = scmp.ne.s32.totalorder %s47, %s50
      %p59 = scmp.eq.s32.totalorder %s28, 1
      %p60 = por %p58, %p59
      %p61 = scmp.ne.s32.totalorder %s50, %s51
      %p62 = scmp.eq.s32.totalorder %s28, 0
      %p63 = por %p61, %p62
      %p64 = scmp.ne.s32.totalorder %s50, %s51
      %p65 = scmp.eq.s32.totalorder %s29, 1
      %p66 = por %p64, %p65
      %p68 = scmp.ne.s32.totalorder %s51, %s67
      %p69 = scmp.eq.s32.totalorder %s29, 0
      %p70 = por %p68, %p69
      %s71 = ssub.s32 %s30, %s42
      %s72 = ssub.s32 %s31, %s38
      %s73 = sor.u32 %s71, %s72
      %p74 = scmp.eq.s32.totalorder %s73, 0
      %s76 = sadd.s32 %s75, 1
      %s77 = scalar_select %p74, %s75, %s76
      %p80 = pneg %p74
      %p81 = scmp.eq.s32.totalorder %s23, 1
      %p82 = por %p80, %p81
      %p83 = scmp.ne.s32.totalorder %s75, %s78
      %p84 = scmp.eq.s32.totalorder %s23, 0
      %p85 = por %p83, %p84
      %p86 = scmp.ne.s32.totalorder %s75, %s78
      %p87 = scmp.eq.s32.totalorder %s28, 1
      %p88 = por %p86, %p87
      %p89 = scmp.ne.s32.totalorder %s78, %s79
      %p90 = scmp.eq.s32.totalorder %s28, 0
      %p91 = por %p89, %p90
      %p92 = scmp.ne.s32.totalorder %s78, %s79
      %p93 = scmp.eq.s32.totalorder %s29, 1
      %p94 = por %p92, %p93
      %p96 = scmp.ne.s32.totalorder %s79, %s95
      %p97 = scmp.eq.s32.totalorder %s29, 0
      %p98 = por %p96, %p97
      %s100 = sadd.s32 %s99, 1
      %p103 = scmp.eq.s32.totalorder %s23, 1
      %p104 = scmp.ne.s32.totalorder %s99, %s101
      %p105 = scmp.eq.s32.totalorder %s23, 0
      %p106 = por %p104, %p105
      %p107 = scmp.ne.s32.totalorder %s99, %s101
      %p108 = scmp.eq.s32.totalorder %s28, 1
      %p109 = por %p107, %p108
      %p110 = scmp.ne.s32.totalorder %s101, %s102
      %p111 = scmp.eq.s32.totalorder %s28, 0
      %p112 = por %p110, %p111
      %p113 = scmp.ne.s32.totalorder %s101, %s102
      %p114 = scmp.eq.s32.totalorder %s29, 1
      %p115 = por %p113, %p114
      %p117 = scmp.ne.s32.totalorder %s102, %s116
      %p118 = scmp.eq.s32.totalorder %s29, 0
      %p119 = por %p117, %p118
      %s121 = sadd.s32 %s120, 1
      %p124 = scmp.eq.s32.totalorder %s23, 1
      %p125 = scmp.ne.s32.totalorder %s120, %s122
      %p126 = scmp.eq.s32.totalorder %s23, 0
      %p127 = por %p125, %p126
      %p128 = scmp.ne.s32.totalorder %s120, %s122
      %p129 = scmp.eq.s32.totalorder %s28, 1
      %p130 = por %p128, %p129
      %p131 = scmp.ne.s32.totalorder %s122, %s123
      %p132 = scmp.eq.s32.totalorder %s28, 0
      %p133 = por %p131, %p132
      %p134 = scmp.ne.s32.totalorder %s122, %s123
      %p135 = scmp.eq.s32.totalorder %s29, 1
      %p136 = por %p134, %p135
      %p138 = scmp.ne.s32.totalorder %s123, %s137
      %p139 = scmp.eq.s32.totalorder %s29, 0
      %p140 = por %p138, %p139
      %s142 = sadd.s32 %s141, 1
      %p145 = scmp.eq.s32.totalorder %s23, 1
      %p146 = scmp.ne.s32.totalorder %s141, %s143
      %p147 = scmp.eq.s32.totalorder %s23, 0
      %p148 = por %p146, %p147
      %p149 = scmp.ne.s32.totalorder %s141, %s143
      %p150 = scmp.eq.s32.totalorder %s28, 1
      %p151 = por %p149, %p150
      %p152 = scmp.ne.s32.totalorder %s143, %s144
      %p153 = scmp.eq.s32.totalorder %s28, 0
      %p154 = por %p152, %p153
      %p155 = scmp.ne.s32.totalorder %s143, %s144
      %p156 = scmp.eq.s32.totalorder %s29, 1
      %p157 = por %p155, %p156
      %p159 = scmp.ne.s32.totalorder %s144, %s158
      %p160 = scmp.eq.s32.totalorder %s29, 0
      %p161 = por %p159, %p160
      %s163 = sadd.s32 %s162, 1
      %p166 = scmp.eq.s32.totalorder %s23, 1
      %p167 = scmp.ne.s32.totalorder %s162, %s164
      %p168 = scmp.eq.s32.totalorder %s23, 0
      %p169 = por %p167, %p168
      %p170 = scmp.ne.s32.totalorder %s162, %s164
      %p171 = scmp.eq.s32.totalorder %s28, 1
      %p172 = por %p170, %p171
      %p173 = scmp.ne.s32.totalorder %s164, %s165
      %p174 = scmp.eq.s32.totalorder %s28, 0
      %p175 = por %p173, %p174
      %p176 = scmp.ne.s32.totalorder %s164, %s165
      %p177 = scmp.eq.s32.totalorder %s29, 1
      %p178 = por %p176, %p177
      %p180 = scmp.ne.s32.totalorder %s165, %s179
      %p181 = scmp.eq.s32.totalorder %s29, 0
      %p182 = por %p180, %p181
      %s184 = sadd.s32 %s183, 1
      %p187 = scmp.eq.s32.totalorder %s23, 1
      %p188 = scmp.ne.s32.totalorder %s183, %s185
      %p189 = scmp.eq.s32.totalorder %s23, 0
      %p190 = por %p188, %p189
      %p191 = scmp.ne.s32.totalorder %s183, %s185
      %p192 = scmp.eq.s32.totalorder %s28, 1
      %p193 = por %p191, %p192
      %p194 = scmp.ne.s32.totalorder %s185, %s186
      %p195 = scmp.eq.s32.totalorder %s28, 0
      %p196 = por %p194, %p195
      %p197 = scmp.ne.s32.totalorder %s185, %s186
      %p198 = scmp.eq.s32.totalorder %s29, 1
      %p199 = por %p197, %p198
      %p201 = scmp.ne.s32.totalorder %s186, %s200
      %p202 = scmp.eq.s32.totalorder %s29, 0
      %p203 = por %p201, %p202
      %s205 = sadd.s32 %s204, 1
      %p208 = scmp.eq.s32.totalorder %s23, 1
      %p209 = scmp.ne.s32.totalorder %s204, %s206
      %p210 = scmp.eq.s32.totalorder %s23, 0
      %p211 = por %p209, %p210
      %p212 = scmp.ne.s32.totalorder %s204, %s206
      %p213 = scmp.eq.s32.totalorder %s28, 1
      %p214 = por %p212, %p213
      %p215 = scmp.ne.s32.totalorder %s206, %s207
      %p216 = scmp.eq.s32.totalorder %s28, 0
      %p217 = por %p215, %p216
      %p218 = scmp.ne.s32.totalorder %s206, %s207
      %p219 = scmp.eq.s32.totalorder %s29, 1
      %p220 = por %p218, %p219
      %p222 = scmp.ne.s32.totalorder %s207, %s221
      %p223 = scmp.eq.s32.totalorder %s29, 0
      %p224 = por %p222, %p223
      %s226 = sadd.s32 %s225, 1
      %p229 = scmp.eq.s32.totalorder %s23, 1
      %p230 = scmp.ne.s32.totalorder %s225, %s227
      %p231 = scmp.eq.s32.totalorder %s23, 0
      %p232 = por %p230, %p231
      %p233 = scmp.ne.s32.totalorder %s225, %s227
      %p234 = scmp.eq.s32.totalorder %s28, 1
      %p235 = por %p233, %p234
      %p236 = scmp.ne.s32.totalorder %s227, %s228
      %p237 = scmp.eq.s32.totalorder %s28, 0
      %p238 = por %p236, %p237
      %p239 = scmp.ne.s32.totalorder %s227, %s228
      %p240 = scmp.eq.s32.totalorder %s29, 1
      %p241 = por %p239, %p240
      %p243 = scmp.ne.s32.totalorder %s228, %s242
      %p244 = scmp.eq.s32.totalorder %s29, 0
      %p245 = por %p243, %p244
      %s247 = sadd.s32 %s246, 1
      %p250 = scmp.eq.s32.totalorder %s23, 1
      %p251 = scmp.ne.s32.totalorder %s246, %s248
      %p252 = scmp.eq.s32.totalorder %s23, 0
      %p253 = por %p251, %p252
      %p254 = scmp.ne.s32.totalorder %s246, %s248
      %p255 = scmp.eq.s32.totalorder %s28, 1
      %p256 = por %p254, %p255
      %p257 = scmp.ne.s32.totalorder %s248, %s249
      %p258 = scmp.eq.s32.totalorder %s28, 0
      %p259 = por %p257, %p258
      %p260 = scmp.ne.s32.totalorder %s248, %s249
      %p261 = scmp.eq.s32.totalorder %s29, 1
      %p262 = por %p260, %p261
      %p264 = scmp.ne.s32.totalorder %s249, %s263
      %p265 = scmp.eq.s32.totalorder %s29, 0
      %p266 = por %p264, %p265
      %s268 = sadd.s32 %s267, 1
      %p271 = scmp.eq.s32.totalorder %s23, 1
      %p272 = scmp.ne.s32.totalorder %s267, %s269
      %p273 = scmp.eq.s32.totalorder %s23, 0
      %p274 = por %p272, %p273
      %p275 = scmp.ne.s32.totalorder %s267, %s269
      %p276 = scmp.eq.s32.totalorder %s28, 1
      %p277 = por %p275, %p276
      %p278 = scmp.ne.s32.totalorder %s269, %s270
      %p279 = scmp.eq.s32.totalorder %s28, 0
      %p280 = por %p278, %p279
      %p281 = scmp.ne.s32.totalorder %s269, %s270
      %p282 = scmp.eq.s32.totalorder %s29, 1
      %p283 = por %p281, %p282
      %p285 = scmp.ne.s32.totalorder %s270, %s284
      %p286 = scmp.eq.s32.totalorder %s29, 0
      %p287 = por %p285, %p286
      %s289 = sadd.s32 %s288, 1
      %p292 = scmp.eq.s32.totalorder %s23, 1
      %p293 = scmp.ne.s32.totalorder %s288, %s290
      %p294 = scmp.eq.s32.totalorder %s23, 0
      %p295 = por %p293, %p294
      %p296 = scmp.ne.s32.totalorder %s288, %s290
      %p297 = scmp.eq.s32.totalorder %s28, 1
      %p298 = por %p296, %p297
      %p299 = scmp.ne.s32.totalorder %s290, %s291
      %p300 = scmp.eq.s32.totalorder %s28, 0
      %p301 = por %p299, %p300
      %p302 = scmp.ne.s32.totalorder %s290, %s291
      %p303 = scmp.eq.s32.totalorder %s29, 1
      %p304 = por %p302, %p303
      %p306 = scmp.ne.s32.totalorder %s291, %s305
      %p307 = scmp.eq.s32.totalorder %s29, 0
      %p308 = por %p306, %p307
      %s310 = sadd.s32 %s309, 1
      %p313 = scmp.eq.s32.totalorder %s23, 1
      %p314 = scmp.ne.s32.totalorder %s309, %s311
      %p315 = scmp.eq.s32.totalorder %s23, 0
      %p316 = por %p314, %p315
      %p317 = scmp.ne.s32.totalorder %s309, %s311
      %p318 = scmp.eq.s32.totalorder %s28, 1
      %p319 = por %p317, %p318
      %p320 = scmp.ne.s32.totalorder %s311, %s312
      %p321 = scmp.eq.s32.totalorder %s28, 0
      %p322 = por %p320, %p321
      %p323 = scmp.ne.s32.totalorder %s311, %s312
      %p324 = scmp.eq.s32.totalorder %s29, 1
      %p325 = por %p323, %p324
      %p327 = scmp.ne.s32.totalorder %s312, %s326
      %p328 = scmp.eq.s32.totalorder %s29, 0
      %p329 = por %p327, %p328
      %s331 = sadd.s32 %s330, 1
      %p334 = scmp.eq.s32.totalorder %s23, 1
      %p335 = scmp.ne.s32.totalorder %s330, %s332
      %p336 = scmp.eq.s32.totalorder %s23, 0
      %p337 = por %p335, %p336
      %p338 = scmp.ne.s32.totalorder %s330, %s332
      %p339 = scmp.eq.s32.totalorder %s28, 1
      %p340 = por %p338, %p339
      %p341 = scmp.ne.s32.totalorder %s332, %s333
      %p342 = scmp.eq.s32.totalorder %s28, 0
      %p343 = por %p341, %p342
      %p344 = scmp.ne.s32.totalorder %s332, %s333
      %p345 = scmp.eq.s32.totalorder %s29, 1
      %p346 = por %p344, %p345
      %p348 = scmp.ne.s32.totalorder %s333, %s347
      %p349 = scmp.eq.s32.totalorder %s29, 0
      %p350 = por %p348, %p349
      %s351 = ssub.s32 %s30, %s42
      %s352 = ssub.s32 %s31, %s38
      %s353 = sor.u32 %s351, %s352
      %p354 = scmp.eq.s32.totalorder %s353, 0
      %s356 = sadd.s32 %s355, 1
      %s357 = scalar_select %p354, %s355, %s356
      %p360 = pneg %p354
      %p361 = scmp.eq.s32.totalorder %s23, 1
      %p362 = por %p360, %p361
      %p363 = scmp.ne.s32.totalorder %s355, %s358
      %p364 = scmp.eq.s32.totalorder %s23, 0
      %p365 = por %p363, %p364
      %p366 = scmp.ne.s32.totalorder %s355, %s358
      %p367 = scmp.eq.s32.totalorder %s28, 1
      %p368 = por %p366, %p367
      %p369 = scmp.ne.s32.totalorder %s358, %s359
      %p370 = scmp.eq.s32.totalorder %s28, 0
      %p371 = por %p369, %p370
      %p372 = scmp.ne.s32.totalorder %s358, %s359
      %p373 = scmp.eq.s32.totalorder %s29, 1
      %p374 = por %p372, %p373
      %p376 = scmp.ne.s32.totalorder %s359, %s375
      %p377 = scmp.eq.s32.totalorder %s29, 0
      %p378 = por %p376, %p377
      %p379 = scmp.le.s32.totalorder 1, %s23
      %p380 = scmp.lt.s32.totalorder %s23, 3
      %p381 = pnand %p379, %p380
      %p382 = pneg %p381
      // Predicated region
      $region9: #{standard_point_head_forward.1} parent=5 // pred_check
        _
      $region10: #{standard_point_head_forward.1} parent=5 // pred_check_branch
        %384 = sbr.rel (%p381) target = $region12
      $region11: #{standard_point_head_forward.1} parent=5 // pred_region
        %s385 = ssub.s32 %s23, 1
        // Predicated region
        $region13: #{standard_point_head_forward.1} parent=11 // pred_check
          %p386 = pneg %p112
        $region14: #{standard_point_head_forward.1} parent=11 // pred_check_branch
          %388 = sbr.rel (%p386) target = $region16
        $region15: #{standard_point_head_forward.1} parent=11 // pred_region
          _
        $region16: #{standard_point_head_forward.1} parent=11 // pred_fallthru
          _
        // Predicated region
        $region17: #{standard_point_head_forward.1} parent=11 // pred_check
          %p389 = pneg %p133
        $region18: #{standard_point_head_forward.1} parent=11 // pred_check_branch
          %391 = sbr.rel (%p389) target = $region20
        $region19: #{standard_point_head_forward.1} parent=11 // pred_region
          _
        $region20: #{standard_point_head_forward.1} parent=11 // pred_fallthru
          _
        // Predicated region
        $region21: #{standard_point_head_forward.1} parent=11 // pred_check
          %p392 = pneg %p154
        $region22: #{standard_point_head_forward.1} parent=11 // pred_check_branch
          %394 = sbr.rel (%p392) target = $region24
        $region23: #{standard_point_head_forward.1} parent=11 // pred_region
          _
        $region24: #{standard_point_head_forward.1} parent=11 // pred_fallthru
          _
        // Predicated region
        $region25: #{standard_point_head_forward.1} parent=11 // pred_check
          %p395 = pneg %p175
        $region26: #{standard_point_head_forward.1} parent=11 // pred_check_branch
          %397 = sbr.rel (%p395) target = $region28
        $region27: #{standard_point_head_forward.1} parent=11 // pred_region
          _
        $region28: #{standard_point_head_forward.1} parent=11 // pred_fallthru
          _
        // Predicated region
        $region29: #{standard_point_head_forward.1} parent=11 // pred_check
          %p398 = pneg %p196
        $region30: #{standard_point_head_forward.1} parent=11 // pred_check_branch
          %400 = sbr.rel (%p398) target = $region32
        $region31: #{standard_point_head_forward.1} parent=11 // pred_region
          _
        $region32: #{standard_point_head_forward.1} parent=11 // pred_fallthru
          _
        // Predicated region
        $region33: #{standard_point_head_forward.1} parent=11 // pred_check
          %p401 = pneg %p217
        $region34: #{standard_point_head_forward.1} parent=11 // pred_check_branch
          %403 = sbr.rel (%p401) target = $region36
        $region35: #{standard_point_head_forward.1} parent=11 // pred_region
          _
        $region36: #{standard_point_head_forward.1} parent=11 // pred_fallthru
          _
        // Predicated region
        $region37: #{standard_point_head_forward.1} parent=11 // pred_check
          %p404 = pneg %p238
        $region38: #{standard_point_head_forward.1} parent=11 // pred_check_branch
          %406 = sbr.rel (%p404) target = $region40
        $region39: #{standard_point_head_forward.1} parent=11 // pred_region
          _
        $region40: #{standard_point_head_forward.1} parent=11 // pred_fallthru
          _
        // Predicated region
        $region41: #{standard_point_head_forward.1} parent=11 // pred_check
          %p407 = pneg %p259
        $region42: #{standard_point_head_forward.1} parent=11 // pred_check_branch
          %409 = sbr.rel (%p407) target = $region44
        $region43: #{standard_point_head_forward.1} parent=11 // pred_region
          _
        $region44: #{standard_point_head_forward.1} parent=11 // pred_fallthru
          _
        // Predicated region
        $region45: #{standard_point_head_forward.1} parent=11 // pred_check
          %p410 = pneg %p280
        $region46: #{standard_point_head_forward.1} parent=11 // pred_check_branch
          %412 = sbr.rel (%p410) target = $region48
        $region47: #{standard_point_head_forward.1} parent=11 // pred_region
          _
        $region48: #{standard_point_head_forward.1} parent=11 // pred_fallthru
          _
        // Predicated region
        $region49: #{standard_point_head_forward.1} parent=11 // pred_check
          %p413 = pneg %p301
        $region50: #{standard_point_head_forward.1} parent=11 // pred_check_branch
          %415 = sbr.rel (%p413) target = $region52
        $region51: #{standard_point_head_forward.1} parent=11 // pred_region
          _
        $region52: #{standard_point_head_forward.1} parent=11 // pred_fallthru
          _
        // Predicated region
        $region53: #{standard_point_head_forward.1} parent=11 // pred_check
          %p416 = pneg %p322
        $region54: #{standard_point_head_forward.1} parent=11 // pred_check_branch
          %418 = sbr.rel (%p416) target = $region56
        $region55: #{standard_point_head_forward.1} parent=11 // pred_region
          _
        $region56: #{standard_point_head_forward.1} parent=11 // pred_fallthru
          _
        // Predicated region
        $region57: #{standard_point_head_forward.1} parent=11 // pred_check
          %p419 = pneg %p343
        $region58: #{standard_point_head_forward.1} parent=11 // pred_check_branch
          %421 = sbr.rel (%p419) target = $region60
        $region59: #{standard_point_head_forward.1} parent=11 // pred_region
          _
        $region60: #{standard_point_head_forward.1} parent=11 // pred_fallthru
          _
      $region12: #{standard_point_head_forward.1} parent=5 // pred_fallthru
        _
      %p422 = scmp.lt.s32.totalorder %s23, 2
      // Predicated region
      $region61: #{standard_point_head_forward.1} parent=5 // pred_check
        %p423 = pneg %p422
      $region62: #{standard_point_head_forward.1} parent=5 // pred_check_branch
        %425 = sbr.rel (%p423) target = $region64
      $region63: #{standard_point_head_forward.1} parent=5 // pred_region
        // Predicated region
        $region65: #{standard_point_head_forward.1} parent=63 // pred_check
          %p426 = pneg %p57
        $region66: #{standard_point_head_forward.1} parent=63 // pred_check_branch
          %428 = sbr.rel (%p426) target = $region68
        $region67: #{standard_point_head_forward.1} parent=63 // pred_region
          %s429 = smul.u32 2, %s31
          %p430 = scmp.lt.s32.totalorder %s30, 1
          %s431 = scalar_select %p430, %s30, 1
          %p432 = scmp.lt.s32.totalorder %s429, 1
          %s433 = scalar_select %p432, %s429, 1
          %s434 = smul.addr %s431, 2
          %s435 = sadd.s32 %s433, %s434
          %s436 = smul.addr %s435, 8
          %s437 = scalar_lea.vmem %s0, %s436
          %s438 = smul.u32 2, %s31
        $region68: #{standard_point_head_forward.1} parent=63 // pred_fallthru
          _
        // Predicated region
        $region69: #{standard_point_head_forward.1} parent=63 // pred_check
          %p439 = pneg %p85
        $region70: #{standard_point_head_forward.1} parent=63 // pred_check_branch
          %441 = sbr.rel (%p439) target = $region72
        $region71: #{standard_point_head_forward.1} parent=63 // pred_region
          %s442 = smul.u32 2, %s31
          %p443 = scmp.lt.s32.totalorder %s30, 1
          %s444 = scalar_select %p443, %s30, 1
          %p445 = scmp.lt.s32.totalorder %s442, 1
          %s446 = scalar_select %p445, %s442, 1
          %s447 = smul.addr %s444, 2
          %s448 = sadd.s32 %s446, %s447
          %s449 = smul.addr %s448, 4
          %s450 = scalar_lea.vmem %s1, %s449
          %s451 = smul.u32 2, %s31
        $region72: #{standard_point_head_forward.1} parent=63 // pred_fallthru
          _
      $region64: #{standard_point_head_forward.1} parent=5 // pred_fallthru
        _
      %p452 = scmp.le.s32.totalorder 1, %s23
      %p453 = scmp.lt.s32.totalorder %s23, 3
      %p454 = pnand %p452, %p453
      %p455 = pneg %p454
      // Predicated region
      $region73: #{standard_point_head_forward.1} parent=5 // pred_check
        _
      $region74: #{standard_point_head_forward.1} parent=5 // pred_check_branch
        %457 = sbr.rel (%p454) target = $region76
      $region75: #{standard_point_head_forward.1} parent=5 // pred_region
        %s458 = ssub.s32 %s23, 1
        %s459 = smul.u32 2, %s33
        %p460 = scmp.lt.s32.totalorder %s32, 1
        %s461 = scalar_select %p460, %s32, 1
        %p462 = scmp.lt.s32.totalorder %s459, 1
        %s463 = scalar_select %p462, %s459, 1
        %s464 = smul.addr %s461, 2
        %s465 = sadd.s32 %s463, %s464
        %s466 = smul.addr %s465, 8
        %s467 = scalar_lea.vmem %s0, %s466
        %p468 = pneg %p63
        %p469 = pneg %p60
        %s470 = smul.u32 2, %s33
        %p471 = scmp.lt.s32.totalorder %s32, 1
        %s472 = scalar_select %p471, %s32, 1
        %p473 = scmp.lt.s32.totalorder %s470, 1
        %s474 = scalar_select %p473, %s470, 1
        %s475 = smul.addr %s472, 2
        %s476 = sadd.s32 %s474, %s475
        %s477 = smul.addr %s476, 4
        %s478 = scalar_lea.vmem %s1, %s477
        %p479 = pneg %p91
        %p480 = pneg %p88
        %p481 = pneg %p112
        %p482 = pneg %p109
        %p483 = pneg %p133
        %p484 = pneg %p130
        %p485 = pneg %p154
        %p486 = pneg %p151
        %p487 = pneg %p175
        %p488 = pneg %p172
        %p489 = pneg %p196
        %p490 = pneg %p193
        %p491 = pneg %p217
        %p492 = pneg %p214
        %p493 = pneg %p238
        %p494 = pneg %p235
        %p495 = pneg %p259
        %p496 = pneg %p256
        %p497 = pneg %p280
        %p498 = pneg %p277
        %p499 = pneg %p301
        %p500 = pneg %p298
        %p501 = pneg %p322
        %p502 = pneg %p319
        %p503 = pneg %p343
        %p504 = pneg %p340
        %p505 = pneg %p371
        %p506 = pneg %p368
        %s507 = sand.u32 %s358, 1
        %s508 = scalar_lea.sflag [#allocation3], %s507
        %s509 = sand.u32 %s358, 1
        %s510 = smul.addr %s509, 8
        %s511 = scalar_lea.vmem [#allocation2], %s510
        %s512 = smul.u32 2, %s33
        %p513 = scmp.lt.s32.totalorder %s32, 1
        %s514 = scalar_select %p513, %s32, 1
        %p515 = scmp.lt.s32.totalorder %s512, 1
        %s516 = scalar_select %p515, %s512, 1
        %s517 = smul.addr %s514, 2
        %s518 = sadd.s32 %s516, %s517
        %s519 = smul.addr %s518, 8
        %s520 = scalar_lea.vmem %s0, %s519
        %s521 = smul.u32 2, %s33
        %s522 = smul.u32 2, %s33
        %p523 = scmp.lt.s32.totalorder %s32, 1
        %s524 = scalar_select %p523, %s32, 1
        %p525 = scmp.lt.s32.totalorder %s522, 1
        %s526 = scalar_select %p525, %s522, 1
        %s527 = smul.addr %s524, 2
        %s528 = sadd.s32 %s526, %s527
        %s529 = smul.addr %s528, 4
        %s530 = scalar_lea.vmem %s1, %s529
        %s531 = smul.u32 2, %s33
        %s532 = smul.u32 2, %s33
        %v533 = vld [vmem:[%s520] sm:$0xff]
        %v534 = vld [vmem:[%s520 + $0x8] sm:$0xff]
        %v535 = vld [vmem:[%s530] sm:$0xff]
        %v536 = vld [vmem:[%s2] sm:$0xff]
        %v537 = vld [vmem:[%s2 + $0x8] sm:$0xff]
        %v538 = vld [vmem:[%s2 + $0x10] sm:$0xff]
        %v539 = vld [vmem:[%s2 + $0x18] sm:$0xff]
        %v540 = vld [vmem:[%s3] sm:$0xff]
        %v541 = vld [vmem:[%s3 + $0x8] sm:$0xff]
        %v542 = vld [vmem:[%s3 + $0x10] sm:$0xff]
        %v543 = vld [vmem:[%s3 + $0x18] sm:$0xff]
        %v544 = vld [vmem:[%s4] sm:$0xff]
        %v545 = vld [vmem:[%s4 + $0x8] sm:$0xff]
        %v546 = vld [vmem:[%s4 + $0x10] sm:$0xff]
        %v547 = vld [vmem:[%s4 + $0x18] sm:$0xff]
        %v549 = vcombine.high %v535, %v535
        %vm550 = vcmask 31744
        %v552 = vsel %vm550, %v540, 0
        %v555 = vsel %vm550, %v541, 0
        %v558 = vsel %vm550, %v542, 0
        %v561 = vsel %vm550, %v543, 0
        %vm563 = vcmask 1043456
        %v564 = vsel %vm563, %v535, 0
        %v566 = vsel %vm563, %v549, 0
        %568 = vmatprep.subr.mxu0 %v566
        %569 = vmatpush1.msra.mxu0 %v564
        %570 = vmatprep.subr.mxu0 0.0
        %571 = vmatpush1.msra.mxu0 0.0
        %572 = vmatprep.subr.mxu0 0.0
        %573 = vmatpush1.msra.mxu0 0.0
        %574 = vmatprep.subr.mxu0 0.0
        %575 = vmatpush1.msra.mxu0 0.0
        %576 = vmatprep.subr.mxu0 0.0
        %577 = vmatpush1.msra.mxu0 0.0
        %578 = vmatprep.subr.mxu0 0.0
        %579 = vmatpush1.msra.mxu0 0.0
        %580 = vmatprep.subr.mxu0 0.0
        %581 = vmatpush1.msra.mxu0 0.0
        %582 = vmatprep.subr.mxu0 0.0
        %583 = vmatpush1.msra.mxu0 0.0
        %584 = vmatprep.subr.mxu0 0.0
        %585 = vmatpush1.msra.mxu0 0.0
        %586 = vmatprep.subr.mxu0 0.0
        %587 = vmatpush1.msra.mxu0 0.0
        %588 = vmatprep.subr.mxu0 0.0
        %589 = vmatpush1.msra.mxu0 0.0
        %590 = vmatprep.subr.mxu0 0.0
        %591 = vmatpush1.msra.mxu0 0.0
        %592 = vmatprep.subr.mxu0 0.0
        %593 = vmatpush1.msra.mxu0 0.0
        %594 = vmatprep.subr.mxu0 0.0
        %595 = vmatpush1.msra.mxu0 0.0
        %596 = vmatprep.subr.mxu0 0.0
        %597 = vmatpush1.msra.mxu0 0.0
        %598 = vmatprep.subr.mxu0 0.0
        %599 = vmatpush1.msra.mxu0 0.0
        %600 = vmatprep.subr.mxu0 0.0
        %601 = vmatpush1.msra.mxu0 0.0
        %602 = vmatprep.subr.mxu0 0.0
        %603 = vmatpush1.msra.mxu0 0.0
        %604 = vmatprep.subr.mxu0 0.0
        %605 = vmatpush1.msra.mxu0 0.0
        %606 = vmatprep.subr.mxu0 0.0
        %607 = vmatpush1.msra.mxu0 0.0
        %608 = vmatprep.subr.mxu0 0.0
        %609 = vmatpush1.msra.mxu0 0.0
        %610 = vmatprep.subr.mxu0 0.0
        %611 = vmatpush1.msra.mxu0 0.0
        %612 = vmatprep.subr.mxu0 0.0
        %613 = vmatpush1.msra.mxu0 0.0
        %614 = vmatprep.subr.mxu0 0.0
        %615 = vmatpush1.msra.mxu0 0.0
        %616 = vmatprep.subr.mxu0 0.0
        %617 = vmatpush1.msra.mxu0 0.0
        %618 = vmatprep.subr.mxu0 0.0
        %619 = vmatpush1.msra.mxu0 0.0
        %620 = vmatprep.subr.mxu0 0.0
        %621 = vmatpush1.msra.mxu0 0.0
        %622 = vmatprep.subr.mxu0 0.0
        %623 = vmatpush1.msra.mxu0 0.0
        %624 = vmatprep.subr.mxu0 0.0
        %625 = vmatpush1.msra.mxu0 0.0
        %626 = vmatprep.subr.mxu0 0.0
        %627 = vmatpush1.msra.mxu0 0.0
        %628 = vmatprep.subr.mxu0 0.0
        %629 = vmatpush1.msra.mxu0 0.0
        %630 = vmatprep.subr.mxu0 0.0
        %631 = vmatpush1.msra.mxu0 0.0
        %632 = vmatprep.mubr.f32.mxu0 0.0
        %633 = vmatmul.mubr.f32.gmra.mrb[0].mxu0 %v552
        %v634 = vpop.f32.mrb[0].mxu0
        %v635 = vadd.f32 0.0, %v634
        %v636 = vpop.f32.mrb[0].mxu0
        %v637 = vadd.f32 0.0, %v636
        %638 = vmatprep.mubr.f32.mxu0 0.0
        %639 = vmatmul.mubr.f32.gmra.mrb[0].mxu0 %v555
        %v640 = vpop.f32.mrb[0].mxu0
        %v641 = vadd.f32 0.0, %v640
        %v642 = vpop.f32.mrb[0].mxu0
        %v643 = vadd.f32 0.0, %v642
        %644 = vmatprep.mubr.f32.mxu0 0.0
        %645 = vmatmul.mubr.f32.gmra.mrb[0].mxu0 %v558
        %v646 = vpop.f32.mrb[0].mxu0
        %v647 = vadd.f32 0.0, %v646
        %v648 = vpop.f32.mrb[0].mxu0
        %v649 = vadd.f32 0.0, %v648
        %650 = vmatprep.mubr.f32.mxu0 0.0
        %651 = vmatmul.mubr.f32.gmra.mrb[0].mxu0 %v561
        %v652 = vpop.f32.mrb[0].mxu0
        %v653 = vadd.f32 0.0, %v652
        %v654 = vpop.f32.mrb[0].mxu0
        %v655 = vadd.f32 0.0, %v654
        %656 = vdwg.mxu0
        %vm657 = vcmask 64512
        %v659 = vsel %vm657, %v536, 0
        %v662 = vsel %vm657, %v537, 0
        %v665 = vsel %vm657, %v538, 0
        %v668 = vsel %vm657, %v539, 0
        %670 = vmatprep.subr.mxu0 %v534
        %671 = vmatpush1.msra.mxu0 %v533
        %672 = vmatprep.subr.mxu0 0.0
        %673 = vmatpush1.msra.mxu0 0.0
        %674 = vmatprep.subr.mxu0 0.0
        %675 = vmatpush1.msra.mxu0 0.0
        %676 = vmatprep.subr.mxu0 0.0
        %677 = vmatpush1.msra.mxu0 0.0
        %678 = vmatprep.subr.mxu0 0.0
        %679 = vmatpush1.msra.mxu0 0.0
        %680 = vmatprep.subr.mxu0 0.0
        %681 = vmatpush1.msra.mxu0 0.0
        %682 = vmatprep.subr.mxu0 0.0
        %683 = vmatpush1.msra.mxu0 0.0
        %684 = vmatprep.subr.mxu0 0.0
        %685 = vmatpush1.msra.mxu0 0.0
        %686 = vmatprep.subr.mxu0 0.0
        %687 = vmatpush1.msra.mxu0 0.0
        %688 = vmatprep.subr.mxu0 0.0
        %689 = vmatpush1.msra.mxu0 0.0
        %690 = vmatprep.subr.mxu0 0.0
        %691 = vmatpush1.msra.mxu0 0.0
        %692 = vmatprep.subr.mxu0 0.0
        %693 = vmatpush1.msra.mxu0 0.0
        %694 = vmatprep.subr.mxu0 0.0
        %695 = vmatpush1.msra.mxu0 0.0
        %696 = vmatprep.subr.mxu0 0.0
        %697 = vmatpush1.msra.mxu0 0.0
        %698 = vmatprep.subr.mxu0 0.0
        %699 = vmatpush1.msra.mxu0 0.0
        %700 = vmatprep.subr.mxu0 0.0
        %701 = vmatpush1.msra.mxu0 0.0
        %702 = vmatprep.subr.mxu0 0.0
        %703 = vmatpush1.msra.mxu0 0.0
        %704 = vmatprep.subr.mxu0 0.0
        %705 = vmatpush1.msra.mxu0 0.0
        %706 = vmatprep.subr.mxu0 0.0
        %707 = vmatpush1.msra.mxu0 0.0
        %708 = vmatprep.subr.mxu0 0.0
        %709 = vmatpush1.msra.mxu0 0.0
        %710 = vmatprep.subr.mxu0 0.0
        %711 = vmatpush1.msra.mxu0 0.0
        %712 = vmatprep.subr.mxu0 0.0
        %713 = vmatpush1.msra.mxu0 0.0
        %714 = vmatprep.subr.mxu0 0.0
        %715 = vmatpush1.msra.mxu0 0.0
        %716 = vmatprep.subr.mxu0 0.0
        %717 = vmatpush1.msra.mxu0 0.0
        %718 = vmatprep.subr.mxu0 0.0
        %719 = vmatpush1.msra.mxu0 0.0
        %720 = vmatprep.subr.mxu0 0.0
        %721 = vmatpush1.msra.mxu0 0.0
        %722 = vmatprep.subr.mxu0 0.0
        %723 = vmatpush1.msra.mxu0 0.0
        %724 = vmatprep.subr.mxu0 0.0
        %725 = vmatpush1.msra.mxu0 0.0
        %726 = vmatprep.subr.mxu0 0.0
        %727 = vmatpush1.msra.mxu0 0.0
        %728 = vmatprep.subr.mxu0 0.0
        %729 = vmatpush1.msra.mxu0 0.0
        %730 = vmatprep.subr.mxu0 0.0
        %731 = vmatpush1.msra.mxu0 0.0
        %732 = vmatprep.subr.mxu0 0.0
        %733 = vmatpush1.msra.mxu0 0.0
        %734 = vmatprep.mubr.f32.mxu0 0.0
        %735 = vmatmul.mubr.f32.gmra.mrb[0].mxu0 %v659
        %v736 = vpop.f32.mrb[0].mxu0
        %v737 = vadd.f32 %v635, %v736
        %v738 = vpop.f32.mrb[0].mxu0
        %v739 = vadd.f32 %v637, %v738
        %740 = vmatprep.mubr.f32.mxu0 0.0
        %741 = vmatmul.mubr.f32.gmra.mrb[0].mxu0 %v662
        %v742 = vpop.f32.mrb[0].mxu0
        %v743 = vadd.f32 %v641, %v742
        %v744 = vpop.f32.mrb[0].mxu0
        %v745 = vadd.f32 %v643, %v744
        %746 = vmatprep.mubr.f32.mxu0 0.0
        %747 = vmatmul.mubr.f32.gmra.mrb[0].mxu0 %v665
        %v748 = vpop.f32.mrb[0].mxu0
        %v749 = vadd.f32 %v647, %v748
        %v750 = vpop.f32.mrb[0].mxu0
        %v751 = vadd.f32 %v649, %v750
        %752 = vmatprep.mubr.f32.mxu0 0.0
        %753 = vmatmul.mubr.f32.gmra.mrb[0].mxu0 %v668
        %v754 = vpop.f32.mrb[0].mxu0
        %v755 = vadd.f32 %v653, %v754
        %v756 = vpop.f32.mrb[0].mxu0
        %v757 = vadd.f32 %v655, %v756
        %758 = vdwg.mxu0
        %760 = vset.pattern.permute.xlu0 0
        %761 = vperm.xlu0 %760, %v544
        %v762 = vpop.permute.xlu0 %761
        %765 = vset.pattern.permute.xlu0 0
        %766 = vperm.xlu0 %765, %v545
        %v767 = vpop.permute.xlu0 %766
        %770 = vset.pattern.permute.xlu0 0
        %771 = vperm.xlu0 %770, %v546
        %v772 = vpop.permute.xlu0 %771
        %775 = vset.pattern.permute.xlu0 0
        %776 = vperm.xlu0 %775, %v547
        %v777 = vpop.permute.xlu0 %776
        %v779 = vadd.f32 %v737, %v762
        %v780 = vadd.f32 %v739, %v762
        %v781 = vadd.f32 %v743, %v767
        %v782 = vadd.f32 %v745, %v767
        %v783 = vadd.f32 %v749, %v772
        %v784 = vadd.f32 %v751, %v772
        %v785 = vadd.f32 %v755, %v777
        %v786 = vadd.f32 %v757, %v777
        %v787 = vmax.f32 %v779, 0.0
        %v788 = vmax.f32 %v780, 0.0
        %v789 = vmax.f32 %v781, 0.0
        %v790 = vmax.f32 %v782, 0.0
        %v791 = vmax.f32 %v783, 0.0
        %v792 = vmax.f32 %v784, 0.0
        %v793 = vmax.f32 %v785, 0.0
        %v794 = vmax.f32 %v786, 0.0
        %v795 = vld [vmem:[%s5] sm:$0xff]
        %v796 = vld [vmem:[%s5 + $0x8] sm:$0xff]
        %v797 = vld [vmem:[%s5 + $0x10] sm:$0xff]
        %v798 = vld [vmem:[%s5 + $0x18] sm:$0xff]
        %v799 = vld [vmem:[%s6] sm:$0xff]
        %v800 = vld [vmem:[%s6 + $0x8] sm:$0xff]
        %v801 = vld [vmem:[%s6 + $0x10] sm:$0xff]
        %v802 = vld [vmem:[%s6 + $0x18] sm:$0xff]
        %v804 = vsel %vm550, %v799, 0
        %v807 = vsel %vm550, %v800, 0
        %v810 = vsel %vm550, %v801, 0
        %v813 = vsel %vm550, %v802, 0
        %815 = vmatprep.subr.mxu0 %v566
        %816 = vmatpush1.msra.mxu0 %v564
        %817 = vmatprep.subr.mxu0 0.0
        %818 = vmatpush1.msra.mxu0 0.0
        %819 = vmatprep.subr.mxu0 0.0
        %820 = vmatpush1.msra.mxu0 0.0
        %821 = vmatprep.subr.mxu0 0.0
        %822 = vmatpush1.msra.mxu0 0.0
        %823 = vmatprep.subr.mxu0 0.0
        %824 = vmatpush1.msra.mxu0 0.0
        %825 = vmatprep.subr.mxu0 0.0
        %826 = vmatpush1.msra.mxu0 0.0
        %827 = vmatprep.subr.mxu0 0.0
        %828 = vmatpush1.msra.mxu0 0.0
        %829 = vmatprep.subr.mxu0 0.0
        %830 = vmatpush1.msra.mxu0 0.0
        %831 = vmatprep.subr.mxu0 0.0
        %832 = vmatpush1.msra.mxu0 0.0
        %833 = vmatprep.subr.mxu0 0.0
        %834 = vmatpush1.msra.mxu0 0.0
        %835 = vmatprep.subr.mxu0 0.0
        %836 = vmatpush1.msra.mxu0 0.0
        %837 = vmatprep.subr.mxu0 0.0
        %838 = vmatpush1.msra.mxu0 0.0
        %839 = vmatprep.subr.mxu0 0.0
        %840 = vmatpush1.msra.mxu0 0.0
        %841 = vmatprep.subr.mxu0 0.0
        %842 = vmatpush1.msra.mxu0 0.0
        %843 = vmatprep.subr.mxu0 0.0
        %844 = vmatpush1.msra.mxu0 0.0
        %845 = vmatprep.subr.mxu0 0.0
        %846 = vmatpush1.msra.mxu0 0.0
        %847 = vmatprep.subr.mxu0 0.0
        %848 = vmatpush1.msra.mxu0 0.0
        %849 = vmatprep.subr.mxu0 0.0
        %850 = vmatpush1.msra.mxu0 0.0
        %851 = vmatprep.subr.mxu0 0.0
        %852 = vmatpush1.msra.mxu0 0.0
        %853 = vmatprep.subr.mxu0 0.0
        %854 = vmatpush1.msra.mxu0 0.0
        %855 = vmatprep.subr.mxu0 0.0
        %856 = vmatpush1.msra.mxu0 0.0
        %857 = vmatprep.subr.mxu0 0.0
        %858 = vmatpush1.msra.mxu0 0.0
        %859 = vmatprep.subr.mxu0 0.0
        %860 = vmatpush1.msra.mxu0 0.0
        %861 = vmatprep.subr.mxu0 0.0
        %862 = vmatpush1.msra.mxu0 0.0
        %863 = vmatprep.subr.mxu0 0.0
        %864 = vmatpush1.msra.mxu0 0.0
        %865 = vmatprep.subr.mxu0 0.0
        %866 = vmatpush1.msra.mxu0 0.0
        %867 = vmatprep.subr.mxu0 0.0
        %868 = vmatpush1.msra.mxu0 0.0
        %869 = vmatprep.subr.mxu0 0.0
        %870 = vmatpush1.msra.mxu0 0.0
        %871 = vmatprep.subr.mxu0 0.0
        %872 = vmatpush1.msra.mxu0 0.0
        %873 = vmatprep.subr.mxu0 0.0
        %874 = vmatpush1.msra.mxu0 0.0
        %875 = vmatprep.subr.mxu0 0.0
        %876 = vmatpush1.msra.mxu0 0.0
        %877 = vmatprep.subr.mxu0 0.0
        %878 = vmatpush1.msra.mxu0 0.0
        %879 = vmatprep.mubr.f32.mxu0 0.0
        %880 = vmatmul.mubr.f32.gmra.mrb[0].mxu0 %v804
        %v881 = vpop.f32.mrb[0].mxu0
        %v882 = vadd.f32 0.0, %v881
        %v883 = vpop.f32.mrb[0].mxu0
        %v884 = vadd.f32 0.0, %v883
        %885 = vmatprep.mubr.f32.mxu0 0.0
        %886 = vmatmul.mubr.f32.gmra.mrb[0].mxu0 %v807
        %v887 = vpop.f32.mrb[0].mxu0
        %v888 = vadd.f32 0.0, %v887
        %v889 = vpop.f32.mrb[0].mxu0
        %v890 = vadd.f32 0.0, %v889
        %891 = vmatprep.mubr.f32.mxu0 0.0
        %892 = vmatmul.mubr.f32.gmra.mrb[0].mxu0 %v810
        %v893 = vpop.f32.mrb[0].mxu0
        %v894 = vadd.f32 0.0, %v893
        %v895 = vpop.f32.mrb[0].mxu0
        %v896 = vadd.f32 0.0, %v895
        %897 = vmatprep.mubr.f32.mxu0 0.0
        %898 = vmatmul.mubr.f32.gmra.mrb[0].mxu0 %v813
        %v899 = vpop.f32.mrb[0].mxu0
        %v900 = vadd.f32 0.0, %v899
        %v901 = vpop.f32.mrb[0].mxu0
        %v902 = vadd.f32 0.0, %v901
        %903 = vdwg.mxu0
        %vm904 = vcmask 261120
        %v906 = vsel %vm904, %v795, 0
        %v909 = vsel %vm904, %v796, 0
        %v912 = vsel %vm904, %v797, 0
        %v915 = vsel %vm904, %v798, 0
        %917 = vmatprep.subr.mxu0 %v788
        %918 = vmatpush1.msra.mxu0 %v787
        %919 = vmatprep.subr.mxu0 %v790
        %920 = vmatpush1.msra.mxu0 %v789
        %921 = vmatprep.subr.mxu0 %v792
        %922 = vmatpush1.msra.mxu0 %v791
        %923 = vmatprep.subr.mxu0 %v794
        %924 = vmatpush1.msra.mxu0 %v793
        %925 = vmatprep.subr.mxu0 0.0
        %926 = vmatpush1.msra.mxu0 0.0
        %927 = vmatprep.subr.mxu0 0.0
        %928 = vmatpush1.msra.mxu0 0.0
        %929 = vmatprep.subr.mxu0 0.0
        %930 = vmatpush1.msra.mxu0 0.0
        %931 = vmatprep.subr.mxu0 0.0
        %932 = vmatpush1.msra.mxu0 0.0
        %933 = vmatprep.subr.mxu0 0.0
        %934 = vmatpush1.msra.mxu0 0.0
        %935 = vmatprep.subr.mxu0 0.0
        %936 = vmatpush1.msra.mxu0 0.0
        %937 = vmatprep.subr.mxu0 0.0
        %938 = vmatpush1.msra.mxu0 0.0
        %939 = vmatprep.subr.mxu0 0.0
        %940 = vmatpush1.msra.mxu0 0.0
        %941 = vmatprep.subr.mxu0 0.0
        %942 = vmatpush1.msra.mxu0 0.0
        %943 = vmatprep.subr.mxu0 0.0
        %944 = vmatpush1.msra.mxu0 0.0
        %945 = vmatprep.subr.mxu0 0.0
        %946 = vmatpush1.msra.mxu0 0.0
        %947 = vmatprep.subr.mxu0 0.0
        %948 = vmatpush1.msra.mxu0 0.0
        %949 = vmatprep.subr.mxu0 0.0
        %950 = vmatpush1.msra.mxu0 0.0
        %951 = vmatprep.subr.mxu0 0.0
        %952 = vmatpush1.msra.mxu0 0.0
        %953 = vmatprep.subr.mxu0 0.0
        %954 = vmatpush1.msra.mxu0 0.0
        %955 = vmatprep.subr.mxu0 0.0
        %956 = vmatpush1.msra.mxu0 0.0
        %957 = vmatprep.subr.mxu0 0.0
        %958 = vmatpush1.msra.mxu0 0.0
        %959 = vmatprep.subr.mxu0 0.0
        %960 = vmatpush1.msra.mxu0 0.0
        %961 = vmatprep.subr.mxu0 0.0
        %962 = vmatpush1.msra.mxu0 0.0
        %963 = vmatprep.subr.mxu0 0.0
        %964 = vmatpush1.msra.mxu0 0.0
        %965 = vmatprep.subr.mxu0 0.0
        %966 = vmatpush1.msra.mxu0 0.0
        %967 = vmatprep.subr.mxu0 0.0
        %968 = vmatpush1.msra.mxu0 0.0
        %969 = vmatprep.subr.mxu0 0.0
        %970 = vmatpush1.msra.mxu0 0.0
        %971 = vmatprep.subr.mxu0 0.0
        %972 = vmatpush1.msra.mxu0 0.0
        %973 = vmatprep.subr.mxu0 0.0
        %974 = vmatpush1.msra.mxu0 0.0
        %975 = vmatprep.subr.mxu0 0.0
        %976 = vmatpush1.msra.mxu0 0.0
        %977 = vmatprep.subr.mxu0 0.0
        %978 = vmatpush1.msra.mxu0 0.0
        %979 = vmatprep.subr.mxu0 0.0
        %980 = vmatpush1.msra.mxu0 0.0
        %981 = vmatprep.mubr.f32.mxu0 0.0
        %982 = vmatmul.mubr.f32.gmra.mrb[0].mxu0 %v906
        %v983 = vpop.f32.mrb[0].mxu0
        %v984 = vadd.f32 %v882, %v983
        %v985 = vpop.f32.mrb[0].mxu0
        %v986 = vadd.f32 %v884, %v985
        %987 = vmatprep.mubr.f32.mxu0 0.0
        %988 = vmatmul.mubr.f32.gmra.mrb[0].mxu0 %v909
        %v989 = vpop.f32.mrb[0].mxu0
        %v990 = vadd.f32 %v888, %v989
        %v991 = vpop.f32.mrb[0].mxu0
        %v992 = vadd.f32 %v890, %v991
        %993 = vmatprep.mubr.f32.mxu0 0.0
        %994 = vmatmul.mubr.f32.gmra.mrb[0].mxu0 %v912
        %v995 = vpop.f32.mrb[0].mxu0
        %v996 = vadd.f32 %v894, %v995
        %v997 = vpop.f32.mrb[0].mxu0
        %v998 = vadd.f32 %v896, %v997
        %999 = vmatprep.mubr.f32.mxu0 0.0
        %1000 = vmatmul.mubr.f32.gmra.mrb[0].mxu0 %v915
        %v1001 = vpop.f32.mrb[0].mxu0
        %v1002 = vadd.f32 %v900, %v1001
        %v1003 = vpop.f32.mrb[0].mxu0
        %v1004 = vadd.f32 %v902, %v1003
        %1005 = vdwg.mxu0
        %v1006 = vld [vmem:[%s7] sm:$0xff]
        %v1007 = vld [vmem:[%s7 + $0x8] sm:$0xff]
        %v1008 = vld [vmem:[%s7 + $0x10] sm:$0xff]
        %v1009 = vld [vmem:[%s7 + $0x18] sm:$0xff]
        %1011 = vset.pattern.permute.xlu0 0
        %1012 = vperm.xlu0 %1011, %v1006
        %v1013 = vpop.permute.xlu0 %1012
        %1016 = vset.pattern.permute.xlu0 0
        %1017 = vperm.xlu0 %1016, %v1007
        %v1018 = vpop.permute.xlu0 %1017
        %1021 = vset.pattern.permute.xlu0 0
        %1022 = vperm.xlu0 %1021, %v1008
        %v1023 = vpop.permute.xlu0 %1022
        %1026 = vset.pattern.permute.xlu0 0
        %1027 = vperm.xlu0 %1026, %v1009
        %v1028 = vpop.permute.xlu0 %1027
        %v1030 = vadd.f32 %v984, %v1013
        %v1031 = vadd.f32 %v986, %v1013
        %v1032 = vadd.f32 %v990, %v1018
        %v1033 = vadd.f32 %v992, %v1018
        %v1034 = vadd.f32 %v996, %v1023
        %v1035 = vadd.f32 %v998, %v1023
        %v1036 = vadd.f32 %v1002, %v1028
        %v1037 = vadd.f32 %v1004, %v1028
        %v1038 = vmax.f32 %v1030, 0.0
        %v1039 = vmax.f32 %v1031, 0.0
        %v1040 = vmax.f32 %v1032, 0.0
        %v1041 = vmax.f32 %v1033, 0.0
        %v1042 = vmax.f32 %v1034, 0.0
        %v1043 = vmax.f32 %v1035, 0.0
        %v1044 = vmax.f32 %v1036, 0.0
        %v1045 = vmax.f32 %v1037, 0.0
        %v1046 = vld [vmem:[%s8] sm:$0xff]
        %v1047 = vld [vmem:[%s8 + $0x8] sm:$0xff]
        %v1048 = vld [vmem:[%s8 + $0x10] sm:$0xff]
        %v1049 = vld [vmem:[%s8 + $0x18] sm:$0xff]
        %v1050 = vld [vmem:[%s9] sm:$0xff]
        %v1051 = vld [vmem:[%s9 + $0x8] sm:$0xff]
        %v1052 = vld [vmem:[%s9 + $0x10] sm:$0xff]
        %v1053 = vld [vmem:[%s9 + $0x18] sm:$0xff]
        %v1055 = vsel %vm550, %v1050, 0
        %v1058 = vsel %vm550, %v1051, 0
        %v1061 = vsel %vm550, %v1052, 0
        %v1064 = vsel %vm550, %v1053, 0
        %1066 = vmatprep.subr.mxu0 %v566
        %1067 = vmatpush1.msra.mxu0 %v564
        %1068 = vmatprep.subr.mxu0 0.0
        %1069 = vmatpush1.msra.mxu0 0.0
        %1070 = vmatprep.subr.mxu0 0.0
        %1071 = vmatpush1.msra.mxu0 0.0
        %1072 = vmatprep.subr.mxu0 0.0
        %1073 = vmatpush1.msra.mxu0 0.0
        %1074 = vmatprep.subr.mxu0 0.0
        %1075 = vmatpush1.msra.mxu0 0.0
        %1076 = vmatprep.subr.mxu0 0.0
        %1077 = vmatpush1.msra.mxu0 0.0
        %1078 = vmatprep.subr.mxu0 0.0
        %1079 = vmatpush1.msra.mxu0 0.0
        %1080 = vmatprep.subr.mxu0 0.0
        %1081 = vmatpush1.msra.mxu0 0.0
        %1082 = vmatprep.subr.mxu0 0.0
        %1083 = vmatpush1.msra.mxu0 0.0
        %1084 = vmatprep.subr.mxu0 0.0
        %1085 = vmatpush1.msra.mxu0 0.0
        %1086 = vmatprep.subr.mxu0 0.0
        %1087 = vmatpush1.msra.mxu0 0.0
        %1088 = vmatprep.subr.mxu0 0.0
        %1089 = vmatpush1.msra.mxu0 0.0
        %1090 = vmatprep.subr.mxu0 0.0
        %1091 = vmatpush1.msra.mxu0 0.0
        %1092 = vmatprep.subr.mxu0 0.0
        %1093 = vmatpush1.msra.mxu0 0.0
        %1094 = vmatprep.subr.mxu0 0.0
        %1095 = vmatpush1.msra.mxu0 0.0
        %1096 = vmatprep.subr.mxu0 0.0
        %1097 = vmatpush1.msra.mxu0 0.0
        %1098 = vmatprep.subr.mxu0 0.0
        %1099 = vmatpush1.msra.mxu0 0.0
        %1100 = vmatprep.subr.mxu0 0.0
        %1101 = vmatpush1.msra.mxu0 0.0
        %1102 = vmatprep.subr.mxu0 0.0
        %1103 = vmatpush1.msra.mxu0 0.0
        %1104 = vmatprep.subr.mxu0 0.0
        %1105 = vmatpush1.msra.mxu0 0.0
        %1106 = vmatprep.subr.mxu0 0.0
        %1107 = vmatpush1.msra.mxu0 0.0
        %1108 = vmatprep.subr.mxu0 0.0
        %1109 = vmatpush1.msra.mxu0 0.0
        %1110 = vmatprep.subr.mxu0 0.0
        %1111 = vmatpush1.msra.mxu0 0.0
        %1112 = vmatprep.subr.mxu0 0.0
        %1113 = vmatpush1.msra.mxu0 0.0
        %1114 = vmatprep.subr.mxu0 0.0
        %1115 = vmatpush1.msra.mxu0 0.0
        %1116 = vmatprep.subr.mxu0 0.0
        %1117 = vmatpush1.msra.mxu0 0.0
        %1118 = vmatprep.subr.mxu0 0.0
        %1119 = vmatpush1.msra.mxu0 0.0
        %1120 = vmatprep.subr.mxu0 0.0
        %1121 = vmatpush1.msra.mxu0 0.0
        %1122 = vmatprep.subr.mxu0 0.0
        %1123 = vmatpush1.msra.mxu0 0.0
        %1124 = vmatprep.subr.mxu0 0.0
        %1125 = vmatpush1.msra.mxu0 0.0
        %1126 = vmatprep.subr.mxu0 0.0
        %1127 = vmatpush1.msra.mxu0 0.0
        %1128 = vmatprep.subr.mxu0 0.0
        %1129 = vmatpush1.msra.mxu0 0.0
        %1130 = vmatprep.mubr.f32.mxu0 0.0
        %1131 = vmatmul.mubr.f32.gmra.mrb[0].mxu0 %v1055
        %v1132 = vpop.f32.mrb[0].mxu0
        %v1133 = vadd.f32 0.0, %v1132
        %v1134 = vpop.f32.mrb[0].mxu0
        %v1135 = vadd.f32 0.0, %v1134
        %1136 = vmatprep.mubr.f32.mxu0 0.0
        %1137 = vmatmul.mubr.f32.gmra.mrb[0].mxu0 %v1058
        %v1138 = vpop.f32.mrb[0].mxu0
        %v1139 = vadd.f32 0.0, %v1138
        %v1140 = vpop.f32.mrb[0].mxu0
        %v1141 = vadd.f32 0.0, %v1140
        %1142 = vmatprep.mubr.f32.mxu0 0.0
        %1143 = vmatmul.mubr.f32.gmra.mrb[0].mxu0 %v1061
        %v1144 = vpop.f32.mrb[0].mxu0
        %v1145 = vadd.f32 0.0, %v1144
        %v1146 = vpop.f32.mrb[0].mxu0
        %v1147 = vadd.f32 0.0, %v1146
        %1148 = vmatprep.mubr.f32.mxu0 0.0
        %1149 = vmatmul.mubr.f32.gmra.mrb[0].mxu0 %v1064
        %v1150 = vpop.f32.mrb[0].mxu0
        %v1151 = vadd.f32 0.0, %v1150
        %v1152 = vpop.f32.mrb[0].mxu0
        %v1153 = vadd.f32 0.0, %v1152
        %1154 = vdwg.mxu0
        %v1156 = vsel %vm904, %v1046, 0
        %v1159 = vsel %vm904, %v1047, 0
        %v1162 = vsel %vm904, %v1048, 0
        %v1165 = vsel %vm904, %v1049, 0
        %1167 = vmatprep.subr.mxu0 %v1039
        %1168 = vmatpush1.msra.mxu0 %v1038
        %1169 = vmatprep.subr.mxu0 %v1041
        %1170 = vmatpush1.msra.mxu0 %v1040
        %1171 = vmatprep.subr.mxu0 %v1043
        %1172 = vmatpush1.msra.mxu0 %v1042
        %1173 = vmatprep.subr.mxu0 %v1045
        %1174 = vmatpush1.msra.mxu0 %v1044
        %1175 = vmatprep.subr.mxu0 0.0
        %1176 = vmatpush1.msra.mxu0 0.0
        %1177 = vmatprep.subr.mxu0 0.0
        %1178 = vmatpush1.msra.mxu0 0.0
        %1179 = vmatprep.subr.mxu0 0.0
        %1180 = vmatpush1.msra.mxu0 0.0
        %1181 = vmatprep.subr.mxu0 0.0
        %1182 = vmatpush1.msra.mxu0 0.0
        %1183 = vmatprep.subr.mxu0 0.0
        %1184 = vmatpush1.msra.mxu0 0.0
        %1185 = vmatprep.subr.mxu0 0.0
        %1186 = vmatpush1.msra.mxu0 0.0
        %1187 = vmatprep.subr.mxu0 0.0
        %1188 = vmatpush1.msra.mxu0 0.0
        %1189 = vmatprep.subr.mxu0 0.0
        %1190 = vmatpush1.msra.mxu0 0.0
        %1191 = vmatprep.subr.mxu0 0.0
        %1192 = vmatpush1.msra.mxu0 0.0
        %1193 = vmatprep.subr.mxu0 0.0
        %1194 = vmatpush1.msra.mxu0 0.0
        %1195 = vmatprep.subr.mxu0 0.0
        %1196 = vmatpush1.msra.mxu0 0.0
        %1197 = vmatprep.subr.mxu0 0.0
        %1198 = vmatpush1.msra.mxu0 0.0
        %1199 = vmatprep.subr.mxu0 0.0
        %1200 = vmatpush1.msra.mxu0 0.0
        %1201 = vmatprep.subr.mxu0 0.0
        %1202 = vmatpush1.msra.mxu0 0.0
        %1203 = vmatprep.subr.mxu0 0.0
        %1204 = vmatpush1.msra.mxu0 0.0
        %1205 = vmatprep.subr.mxu0 0.0
        %1206 = vmatpush1.msra.mxu0 0.0
        %1207 = vmatprep.subr.mxu0 0.0
        %1208 = vmatpush1.msra.mxu0 0.0
        %1209 = vmatprep.subr.mxu0 0.0
        %1210 = vmatpush1.msra.mxu0 0.0
        %1211 = vmatprep.subr.mxu0 0.0
        %1212 = vmatpush1.msra.mxu0 0.0
        %1213 = vmatprep.subr.mxu0 0.0
        %1214 = vmatpush1.msra.mxu0 0.0
        %1215 = vmatprep.subr.mxu0 0.0
        %1216 = vmatpush1.msra.mxu0 0.0
        %1217 = vmatprep.subr.mxu0 0.0
        %1218 = vmatpush1.msra.mxu0 0.0
        %1219 = vmatprep.subr.mxu0 0.0
        %1220 = vmatpush1.msra.mxu0 0.0
        %1221 = vmatprep.subr.mxu0 0.0
        %1222 = vmatpush1.msra.mxu0 0.0
        %1223 = vmatprep.subr.mxu0 0.0
        %1224 = vmatpush1.msra.mxu0 0.0
        %1225 = vmatprep.subr.mxu0 0.0
        %1226 = vmatpush1.msra.mxu0 0.0
        %1227 = vmatprep.subr.mxu0 0.0
        %1228 = vmatpush1.msra.mxu0 0.0
        %1229 = vmatprep.subr.mxu0 0.0
        %1230 = vmatpush1.msra.mxu0 0.0
        %1231 = vmatprep.mubr.f32.mxu0 0.0
        %1232 = vmatmul.mubr.f32.gmra.mrb[0].mxu0 %v1156
        %v1233 = vpop.f32.mrb[0].mxu0
        %v1234 = vadd.f32 %v1133, %v1233
        %v1235 = vpop.f32.mrb[0].mxu0
        %v1236 = vadd.f32 %v1135, %v1235
        %1237 = vmatprep.mubr.f32.mxu0 0.0
        %1238 = vmatmul.mubr.f32.gmra.mrb[0].mxu0 %v1159
        %v1239 = vpop.f32.mrb[0].mxu0
        %v1240 = vadd.f32 %v1139, %v1239
        %v1241 = vpop.f32.mrb[0].mxu0
        %v1242 = vadd.f32 %v1141, %v1241
        %1243 = vmatprep.mubr.f32.mxu0 0.0
        %1244 = vmatmul.mubr.f32.gmra.mrb[0].mxu0 %v1162
        %v1245 = vpop.f32.mrb[0].mxu0
        %v1246 = vadd.f32 %v1145, %v1245
        %v1247 = vpop.f32.mrb[0].mxu0
        %v1248 = vadd.f32 %v1147, %v1247
        %1249 = vmatprep.mubr.f32.mxu0 0.0
        %1250 = vmatmul.mubr.f32.gmra.mrb[0].mxu0 %v1165
        %v1251 = vpop.f32.mrb[0].mxu0
        %v1252 = vadd.f32 %v1151, %v1251
        %v1253 = vpop.f32.mrb[0].mxu0
        %v1254 = vadd.f32 %v1153, %v1253
        %1255 = vdwg.mxu0
        %v1256 = vld [vmem:[%s10] sm:$0xff]
        %v1257 = vld [vmem:[%s10 + $0x8] sm:$0xff]
        %v1258 = vld [vmem:[%s10 + $0x10] sm:$0xff]
        %v1259 = vld [vmem:[%s10 + $0x18] sm:$0xff]
        %1261 = vset.pattern.permute.xlu0 0
        %1262 = vperm.xlu0 %1261, %v1256
        %v1263 = vpop.permute.xlu0 %1262
        %1266 = vset.pattern.permute.xlu0 0
        %1267 = vperm.xlu0 %1266, %v1257
        %v1268 = vpop.permute.xlu0 %1267
        %1271 = vset.pattern.permute.xlu0 0
        %1272 = vperm.xlu0 %1271, %v1258
        %v1273 = vpop.permute.xlu0 %1272
        %1276 = vset.pattern.permute.xlu0 0
        %1277 = vperm.xlu0 %1276, %v1259
        %v1278 = vpop.permute.xlu0 %1277
        %v1280 = vadd.f32 %v1234, %v1263
        %v1281 = vadd.f32 %v1236, %v1263
        %v1282 = vadd.f32 %v1240, %v1268
        %v1283 = vadd.f32 %v1242, %v1268
        %v1284 = vadd.f32 %v1246, %v1273
        %v1285 = vadd.f32 %v1248, %v1273
        %v1286 = vadd.f32 %v1252, %v1278
        %v1287 = vadd.f32 %v1254, %v1278
        %v1288 = vmax.f32 %v1280, 0.0
        %v1289 = vmax.f32 %v1281, 0.0
        %v1290 = vmax.f32 %v1282, 0.0
        %v1291 = vmax.f32 %v1283, 0.0
        %v1292 = vmax.f32 %v1284, 0.0
        %v1293 = vmax.f32 %v1285, 0.0
        %v1294 = vmax.f32 %v1286, 0.0
        %v1295 = vmax.f32 %v1287, 0.0
        %v1296 = vld [vmem:[%s11] sm:$0xf]
        %v1297 = vld [vmem:[%s12] sm:$0xf]
        %v1299 = vsel %vm550, %v1297, 0
        %1301 = vmatprep.subr.mxu0 %v566
        %1302 = vmatpush1.msra.mxu0 %v564
        %1303 = vmatprep.subr.mxu0 0.0
        %1304 = vmatpush1.msra.mxu0 0.0
        %1305 = vmatprep.subr.mxu0 0.0
        %1306 = vmatpush1.msra.mxu0 0.0
        %1307 = vmatprep.subr.mxu0 0.0
        %1308 = vmatpush1.msra.mxu0 0.0
        %1309 = vmatprep.subr.mxu0 0.0
        %1310 = vmatpush1.msra.mxu0 0.0
        %1311 = vmatprep.subr.mxu0 0.0
        %1312 = vmatpush1.msra.mxu0 0.0
        %1313 = vmatprep.subr.mxu0 0.0
        %1314 = vmatpush1.msra.mxu0 0.0
        %1315 = vmatprep.subr.mxu0 0.0
        %1316 = vmatpush1.msra.mxu0 0.0
        %1317 = vmatprep.subr.mxu0 0.0
        %1318 = vmatpush1.msra.mxu0 0.0
        %1319 = vmatprep.subr.mxu0 0.0
        %1320 = vmatpush1.msra.mxu0 0.0
        %1321 = vmatprep.subr.mxu0 0.0
        %1322 = vmatpush1.msra.mxu0 0.0
        %1323 = vmatprep.subr.mxu0 0.0
        %1324 = vmatpush1.msra.mxu0 0.0
        %1325 = vmatprep.subr.mxu0 0.0
        %1326 = vmatpush1.msra.mxu0 0.0
        %1327 = vmatprep.subr.mxu0 0.0
        %1328 = vmatpush1.msra.mxu0 0.0
        %1329 = vmatprep.subr.mxu0 0.0
        %1330 = vmatpush1.msra.mxu0 0.0
        %1331 = vmatprep.subr.mxu0 0.0
        %1332 = vmatpush1.msra.mxu0 0.0
        %1333 = vmatprep.subr.mxu0 0.0
        %1334 = vmatpush1.msra.mxu0 0.0
        %1335 = vmatprep.subr.mxu0 0.0
        %1336 = vmatpush1.msra.mxu0 0.0
        %1337 = vmatprep.subr.mxu0 0.0
        %1338 = vmatpush1.msra.mxu0 0.0
        %1339 = vmatprep.subr.mxu0 0.0
        %1340 = vmatpush1.msra.mxu0 0.0
        %1341 = vmatprep.subr.mxu0 0.0
        %1342 = vmatpush1.msra.mxu0 0.0
        %1343 = vmatprep.subr.mxu0 0.0
        %1344 = vmatpush1.msra.mxu0 0.0
        %1345 = vmatprep.subr.mxu0 0.0
        %1346 = vmatpush1.msra.mxu0 0.0
        %1347 = vmatprep.subr.mxu0 0.0
        %1348 = vmatpush1.msra.mxu0 0.0
        %1349 = vmatprep.subr.mxu0 0.0
        %1350 = vmatpush1.msra.mxu0 0.0
        %1351 = vmatprep.subr.mxu0 0.0
        %1352 = vmatpush1.msra.mxu0 0.0
        %1353 = vmatprep.subr.mxu0 0.0
        %1354 = vmatpush1.msra.mxu0 0.0
        %1355 = vmatprep.subr.mxu0 0.0
        %1356 = vmatpush1.msra.mxu0 0.0
        %1357 = vmatprep.subr.mxu0 0.0
        %1358 = vmatpush1.msra.mxu0 0.0
        %1359 = vmatprep.subr.mxu0 0.0
        %1360 = vmatpush1.msra.mxu0 0.0
        %1361 = vmatprep.subr.mxu0 0.0
        %1362 = vmatpush1.msra.mxu0 0.0
        %1363 = vmatprep.subr.mxu0 0.0
        %1364 = vmatpush1.msra.mxu0 0.0
        %1365 = vmatprep.mubr.f32.mxu0 0.0
        %1366 = vmatmul.mubr.f32.gmra.mrb[0].mxu0 %v1299
        %v1367 = vpop.f32.mrb[0].mxu0
        %v1368 = vadd.f32 0.0, %v1367
        %v1369 = vpop.f32.mrb[0].mxu0
        %v1370 = vadd.f32 0.0, %v1369
        %1371 = vdwg.mxu0
        %v1373 = vsel %vm904, %v1296, 0
        %1375 = vmatprep.subr.mxu0 %v1289
        %1376 = vmatpush1.msra.mxu0 %v1288
        %1377 = vmatprep.subr.mxu0 %v1291
        %1378 = vmatpush1.msra.mxu0 %v1290
        %1379 = vmatprep.subr.mxu0 %v1293
        %1380 = vmatpush1.msra.mxu0 %v1292
        %1381 = vmatprep.subr.mxu0 %v1295
        %1382 = vmatpush1.msra.mxu0 %v1294
        %1383 = vmatprep.subr.mxu0 0.0
        %1384 = vmatpush1.msra.mxu0 0.0
        %1385 = vmatprep.subr.mxu0 0.0
        %1386 = vmatpush1.msra.mxu0 0.0
        %1387 = vmatprep.subr.mxu0 0.0
        %1388 = vmatpush1.msra.mxu0 0.0
        %1389 = vmatprep.subr.mxu0 0.0
        %1390 = vmatpush1.msra.mxu0 0.0
        %1391 = vmatprep.subr.mxu0 0.0
        %1392 = vmatpush1.msra.mxu0 0.0
        %1393 = vmatprep.subr.mxu0 0.0
        %1394 = vmatpush1.msra.mxu0 0.0
        %1395 = vmatprep.subr.mxu0 0.0
        %1396 = vmatpush1.msra.mxu0 0.0
        %1397 = vmatprep.subr.mxu0 0.0
        %1398 = vmatpush1.msra.mxu0 0.0
        %1399 = vmatprep.subr.mxu0 0.0
        %1400 = vmatpush1.msra.mxu0 0.0
        %1401 = vmatprep.subr.mxu0 0.0
        %1402 = vmatpush1.msra.mxu0 0.0
        %1403 = vmatprep.subr.mxu0 0.0
        %1404 = vmatpush1.msra.mxu0 0.0
        %1405 = vmatprep.subr.mxu0 0.0
        %1406 = vmatpush1.msra.mxu0 0.0
        %1407 = vmatprep.subr.mxu0 0.0
        %1408 = vmatpush1.msra.mxu0 0.0
        %1409 = vmatprep.subr.mxu0 0.0
        %1410 = vmatpush1.msra.mxu0 0.0
        %1411 = vmatprep.subr.mxu0 0.0
        %1412 = vmatpush1.msra.mxu0 0.0
        %1413 = vmatprep.subr.mxu0 0.0
        %1414 = vmatpush1.msra.mxu0 0.0
        %1415 = vmatprep.subr.mxu0 0.0
        %1416 = vmatpush1.msra.mxu0 0.0
        %1417 = vmatprep.subr.mxu0 0.0
        %1418 = vmatpush1.msra.mxu0 0.0
        %1419 = vmatprep.subr.mxu0 0.0
        %1420 = vmatpush1.msra.mxu0 0.0
        %1421 = vmatprep.subr.mxu0 0.0
        %1422 = vmatpush1.msra.mxu0 0.0
        %1423 = vmatprep.subr.mxu0 0.0
        %1424 = vmatpush1.msra.mxu0 0.0
        %1425 = vmatprep.subr.mxu0 0.0
        %1426 = vmatpush1.msra.mxu0 0.0
        %1427 = vmatprep.subr.mxu0 0.0
        %1428 = vmatpush1.msra.mxu0 0.0
        %1429 = vmatprep.subr.mxu0 0.0
        %1430 = vmatpush1.msra.mxu0 0.0
        %1431 = vmatprep.subr.mxu0 0.0
        %1432 = vmatpush1.msra.mxu0 0.0
        %1433 = vmatprep.subr.mxu0 0.0
        %1434 = vmatpush1.msra.mxu0 0.0
        %1435 = vmatprep.subr.mxu0 0.0
        %1436 = vmatpush1.msra.mxu0 0.0
        %1437 = vmatprep.subr.mxu0 0.0
        %1438 = vmatpush1.msra.mxu0 0.0
        %1439 = vmatprep.mubr.f32.mxu0 0.0
        %1440 = vmatmul.mubr.f32.gmra.mrb[0].mxu0 %v1373
        %v1441 = vpop.f32.mrb[0].mxu0
        %v1442 = vadd.f32 %v1368, %v1441
        %v1443 = vpop.f32.mrb[0].mxu0
        %v1444 = vadd.f32 %v1370, %v1443
        %1445 = vdwg.mxu0
        %v1446 = vld [vmem:[%s13] sm:$0xf]
        %1448 = vset.pattern.permute.xlu0 0
        %1449 = vperm.xlu0 %1448, %v1446
        %v1450 = vpop.permute.xlu0 %1449
        %v1452 = vadd.f32 %v1442, %v1450
        %v1453 = vadd.f32 %v1444, %v1450
        %v1456 = vcombine.low %v1452, %v1453
        %1458 = vst [vmem:[%s511] sm:$0xff] %v1456
        %s1459 = sand.u32 %s358, 1
        %s1460 = scalar_lea.sflag [#allocation3], %s1459
        %s1461 = sand.u32 %s358, 1
        %s1462 = smul.addr %s1461, 8
        %s1463 = scalar_lea.vmem [#allocation2], %s1462
        // Predicated region
        $region77: #{standard_point_head_forward.1} parent=75 // pred_check
          %p1464 = pneg %p368
        $region78: #{standard_point_head_forward.1} parent=75 // pred_check_branch
          %1466 = sbr.rel (%p1464) target = $region80
        $region79: #{standard_point_head_forward.1} parent=75 // pred_region
          %s1467 = smul.u32 2, %s33
          %s1469 = ssub.s32 128, 128
          %1470 = vsyncadd %s1460, %s1469
          %s1471 = smul.addr %s32, 2
          %s1472 = sadd.s32 %s1467, %s1471
          %s1473 = smul.addr %s1472, 64
          %s1474 = scalar_lea.hbm %s14, %s1473
          %s1476 = sshll.u32 %s1463, 4
          %s1477 = int_to_ptr.vmem [resolvable:$true] %s1476
          %1479 = dma.vmem_to_hbm [thread:$0]  %s1477, 128, %s1474, %s1460
        $region80: #{standard_point_head_forward.1} parent=75 // pred_fallthru
          _
      $region76: #{standard_point_head_forward.1} parent=5 // pred_fallthru
        _
      %p1480 = scmp.le.s32.totalorder 2, %s23
      // Predicated region
      $region81: #{standard_point_head_forward.1} parent=5 // pred_check
        %p1481 = pneg %p1480
      $region82: #{standard_point_head_forward.1} parent=5 // pred_check_branch
        %1483 = sbr.rel (%p1481) target = $region84
      $region83: #{standard_point_head_forward.1} parent=5 // pred_region
        %s1484 = ssub.s32 %s23, 2
        // Predicated region
        $region85: #{standard_point_head_forward.1} parent=83 // pred_check
          %p1485 = pneg %p374
        $region86: #{standard_point_head_forward.1} parent=83 // pred_check_branch
          %1487 = sbr.rel (%p1485) target = $region88
        $region87: #{standard_point_head_forward.1} parent=83 // pred_region
          %s1488 = sand.u32 %s359, 1
          %s1489 = scalar_lea.sflag [#allocation3], %s1488
          %s1490 = sand.u32 %s359, 1
          %s1491 = smul.addr %s1490, 8
          %s1492 = scalar_lea.vmem [#allocation2], %s1491
          %1493 = dma.done %s1489, 128
        $region88: #{standard_point_head_forward.1} parent=83 // pred_fallthru
          _
      $region84: #{standard_point_head_forward.1} parent=5 // pred_fallthru
        _
    $region6: #{standard_point_head_forward.1} parent=1 // loop_footer
      %s27 = sadd.s32 1, %s23
    $region7: #{standard_point_head_forward.1} parent=1 // loop_footer_branch
      %22 = sbr.rel target = $region3
    $region8: #{standard_point_head_forward.1} parent=1 // loop_exit
      _
    %1494 = vsyncpa [#allocation3], 1
    %s1495 = scalar_lea.sflag [#allocation3], 1
    %1496 = vsyncpa %s1495, 1

</llo_original>
